<compile_context>
chip_gen: v7x
topology: tpu7x:2x2x1
jax: 0.10.0
libtpu: 0.0.40
codegen_flags: <defaults>
</compile_context>

<pallas_src>
import jax
import jax.numpy as jnp
from jax.experimental import pallas as pl
from jax.experimental.pallas import tpu as pltpu


# ----------------------- layer math (traced inside the fused kernel) -----------------------


def _conv1_bn_relu_vpu(x, w_ref, b_ref, *, kernel, c_in, padding):
    """First conv (tiny C_in): VPU broadcast-FMAs, no MXU.

    x: (L, C_in) value; w_ref: (K*C_in, C_out) ref (row index k*C_in + c); b_ref: (1, C_out).
    Returns ReLU(conv(x) + b): (L_out, C_out).
    """
    L = x.shape[0]
    L_out = L + 2 * padding - kernel + 1
    if padding:
        z = jnp.zeros((padding, c_in), x.dtype)
        x = jnp.concatenate([z, x, z], axis=0)                  # in-kernel zero pad
    w = w_ref[...]                                              # (K*C_in, C_out), tiny (2 vregs)
    c_out = w.shape[-1]
    acc = jnp.zeros((L_out, c_out), jnp.float32)
    for k in range(kernel):                                     # static unroll (K=3)
        xs = x[k:k + L_out, :]                                  # contiguous sublane slice
        for c in range(c_in):                                   # static unroll (C_in=4)
            r = k * c_in + c
            acc = acc + xs[:, c:c + 1] * w[r:r + 1, :]          # (L_out,1)*(1,C_out) FMA
    return jnp.maximum(acc + b_ref[...], 0.0)


def _conv_bn_relu_mxu(x, w_ref, b_ref, *, kernel, padding):
    """128->128 conv as a single im2col matmul (fills the MXU contraction depth).

    x: (L, C_in); w_ref: (K*C_in, C_out) ref with row index k*C_in + c; b_ref: (1, C_out).
    """
    L, C = x.shape
    L_out = L + 2 * padding - kernel + 1
    if padding:
        z = jnp.zeros((padding, C), x.dtype)
        x = jnp.concatenate([z, x, z], axis=0)                  # in-kernel zero pad
    # Lane-axis concat at 128-aligned offsets: (L_out, K*C_in) im2col matrix.
    cols = jnp.concatenate([x[k:k + L_out, :] for k in range(kernel)], axis=1)
    acc = jnp.dot(cols, w_ref[...], preferred_element_type=jnp.float32)
    return jnp.maximum(acc + b_ref[...], 0.0)


def _maxpool1d(x, *, kernel, stride, padding):
    """MaxPool1d (floor mode, -inf padding like PyTorch) on an (L, C) value."""
    L, C = x.shape
    L_out = (L + 2 * padding - kernel) // stride + 1
    if padding:
        neg = jnp.full((padding, C), -jnp.inf, x.dtype)
        x = jnp.concatenate([neg, x, neg], axis=0)              # in-kernel -inf pad
    n_valid = x.shape[0] - kernel + 1
    # Sliding (stride-1) max over `kernel` shifted contiguous slices: pure VPU maxima.
    m = x[:n_valid, :]
    for j in range(1, kernel):
        m = jnp.maximum(m, x[j:j + n_valid, :])
    if stride == 1:
        return m                                                # n_valid == L_out
    if L_out == 1:
        return m[0:1, :]
    # Strided pools here have L_out <= 4: pick the L_out sampled rows.
    return jnp.concatenate([m[l * stride:l * stride + 1, :] for l in range(L_out)], axis=0)


# ----------------------------------- fused Pallas kernel -----------------------------------


def _mhc_fused_kernel(x_ref, w1_ref, b1_ref, w2_ref, b2_ref, w3_ref, b3_ref,
                      w4_ref, b4_ref, o_ref):
    # A block of batch elements per grid step; statically unrolled so the scheduler can
    # interleave MXU pushes across elements.  Every intermediate lives in VMEM / vregs.
    block_n = x_ref.shape[0]
    c_in = x_ref.shape[2]
    for b in range(block_n):
        h = _conv1_bn_relu_vpu(x_ref[b], w1_ref, b1_ref, kernel=3, c_in=c_in, padding=1)
        h = _maxpool1d(h, kernel=3, stride=1, padding=1)
        h = _conv_bn_relu_mxu(h, w2_ref, b2_ref, kernel=3, padding=1)
        h = _maxpool1d(h, kernel=5, stride=3, padding=0)
        h = _conv_bn_relu_mxu(h, w3_ref, b3_ref, kernel=3, padding=1)
        h = _maxpool1d(h, kernel=4, stride=2, padding=1)
        h = _conv_bn_relu_mxu(h, w4_ref, b4_ref, kernel=3, padding=1)
        h = _maxpool1d(h, kernel=4, stride=2, padding=1)
        o_ref[b] = h.astype(o_ref.dtype)                        # (L_final, 128): lane-dense store


# ----------------------------------- host-side wrapper -------------------------------------


def _conv_len(l, kernel=3, padding=1):
    return l + 2 * padding - kernel + 1


def _pool_len(l, kernel, stride, padding):
    return (l + 2 * padding - kernel) // stride + 1


def _final_len(L):
    l = _conv_len(L); l = _pool_len(l, 3, 1, 1)
    l = _conv_len(l); l = _pool_len(l, 5, 3, 0)
    l = _conv_len(l); l = _pool_len(l, 4, 2, 1)
    l = _conv_len(l); l = _pool_len(l, 4, 2, 1)
    return l


@jax.jit
def mhc_model_forward(x_ncl, packed_params):
    """MHCModel forward. x_ncl: (N, C_in, L) like PyTorch; returns (N, 128, L_final)."""
    N, C_in, L = x_ncl.shape
    (w1, b1), (w2, b2), (w3, b3), (w4, b4) = packed_params
    C_out = w1.shape[-1]
    L_final = _final_len(L)

    # Batch block per grid step (amortizes per-step overhead; larger batches still split
    # across v7x's two TensorCores via the "parallel" grid axis).
    block_n = max(1, min(8, N))
    pad_n = (-N) % block_n
    n_padded = N + pad_n

    x_nlc = jnp.transpose(x_ncl, (0, 2, 1))                     # NCL -> NLC (channels on lanes)
    if pad_n:
        x_nlc = jnp.pad(x_nlc, ((0, pad_n), (0, 0), (0, 0)))

    def full(a):                                                # whole-array, grid-invariant block
        return pl.BlockSpec(a.shape, lambda n, _nd=a.ndim: (0,) * _nd)

    out_nlc = pl.pallas_call(
        _mhc_fused_kernel,
        out_shape=jax.ShapeDtypeStruct((n_padded, L_final, C_out), x_ncl.dtype),
        grid_spec=pltpu.PrefetchScalarGridSpec(
            num_scalar_prefetch=0,
            grid=(n_padded // block_n,),
            in_specs=[
                pl.BlockSpec((block_n, L, C_in), lambda n: (n, 0, 0)),
                full(w1), full(b1), full(w2), full(b2),
                full(w3), full(b3), full(w4), full(b4),
            ],
            out_specs=pl.BlockSpec((block_n, L_final, C_out), lambda n: (n, 0, 0)),
        ),
        compiler_params=pltpu.CompilerParams(
            dimension_semantics=("parallel",)),                 # v7x: 2 TCs split the batch blocks
    )(x_nlc, w1, b1, w2, b2, w3, b3, w4, b4)

    if pad_n:
        out_nlc = out_nlc[:N]
    return jnp.transpose(out_nlc, (0, 2, 1))                    # NLC -> NCL


# ----------------------------------- parameter setup ---------------------------------------


def init_block_params(key, c_in, c_out, k=3, eps=1e-5):
    """Deterministic Conv1d + BatchNorm1d(eval) params with BN folded into the conv.

    Returns (w, b) in PyTorch layout: w (C_out, C_in, K), b (C_out,)."""
    kw, kb, kg, kbeta, km, kv = jax.random.split(key, 6)
    w = jax.random.normal(kw, (c_out, c_in, k), jnp.float32) * 0.1
    b = jax.random.normal(kb, (c_out,), jnp.float32) * 0.1
    gamma = 1.0 + 0.1 * jax.random.normal(kg, (c_out,), jnp.float32)
    beta = 0.1 * jax.random.normal(kbeta, (c_out,), jnp.float32)
    run_mean = 0.1 * jax.random.normal(km, (c_out,), jnp.float32)
    run_var = 1.0 + 0.1 * jax.random.uniform(kv, (c_out,), jnp.float32)
    scale = gamma / jnp.sqrt(run_var + eps)
    w_fold = w * scale[:, None, None]                           # fold BN scale
    b_fold = (b - run_mean) * scale + beta                      # fold BN shift
    return w_fold, b_fold


def pack_params_for_kernel(folded_params):
    """PyTorch-layout folded weights -> kernel layouts.

    Every layer: (K*C_in, C_out) im2col matrix, row index = k*C_in + c (layer 1 uses it with
    VPU row-slice FMAs, layers 2-4 as the MXU im2col operand).  Biases become (1, C_out)."""
    packed = []
    for (w, b) in folded_params:
        c_out, c_in, k = w.shape
        w_col = jnp.transpose(w, (2, 1, 0)).reshape(k * c_in, c_out)   # (K*C_in, C_out)
        packed.append((w_col, b.reshape(1, c_out)))
    return tuple(packed)


# ----------------------------------- pure-XLA reference ------------------------------------


def _reference_forward(x_ncl, folded_params):
    """Reference forward (lax conv + reduce_window) of the BN-folded network."""
    def conv_bn_relu(x, w, b, padding):
        y = jax.lax.conv_general_dilated(
            x, w, window_strides=(1,), padding=[(padding, padding)],
            dimension_numbers=("NCH", "OIH", "NCH"),
            precision=jax.lax.Precision.HIGHEST)
        return jax.nn.relu(y + b[None, :, None])

    def maxpool(x, kernel, stride, padding):
        return jax.lax.reduce_window(
            x, -jnp.inf, jax.lax.max,
            window_dimensions=(1, 1, kernel), window_strides=(1, 1, stride),
            padding=[(0, 0), (0, 0), (padding, padding)])

    (w1, b1), (w2, b2), (w3, b3), (w4, b4) = folded_params
    x = conv_bn_relu(x_ncl, w1, b1, 1); x = maxpool(x, 3, 1, 1)
    x = conv_bn_relu(x, w2, b2, 1);     x = maxpool(x, 5, 3, 0)
    x = conv_bn_relu(x, w3, b3, 1);     x = maxpool(x, 4, 2, 1)
    x = conv_bn_relu(x, w4, b4, 1);     x = maxpool(x, 4, 2, 1)
    return x


# ----------------------------------------- main ---------------------------------------------

if __name__ == "__main__":
    N, C_IN, L = 2, 4, 16
    key = jax.random.PRNGKey(0)
    kx, k1, k2, k3, k4 = jax.random.split(key, 5)

    x = jax.random.normal(kx, (N, C_IN, L), jnp.float32)        # NCL, like the PyTorch module

    folded = (
        init_block_params(k1, C_IN, 128),
        init_block_params(k2, 128, 128),
        init_block_params(k3, 128, 128),
        init_block_params(k4, 128, 128),
    )
    packed = pack_params_for_kernel(folded)

    out = jax.block_until_ready(mhc_model_forward(x, packed))

    # Expected shape for L=16: (N, 128, 1)
    assert out.shape == (N, 128, 1), out.shape
    assert bool(jnp.all(jnp.isfinite(out)))

    # Numerical check against a pure-XLA reference of the same (BN-folded) network.
    ref = _reference_forward(x, folded)
    rel_err = float(jnp.max(jnp.abs(out - ref)) / jnp.maximum(jnp.max(jnp.abs(ref)), 1e-6))
    assert rel_err < 5e-2, f"mismatch vs XLA reference: rel_err={rel_err}"

    print("KERNEL_OK")
</pallas_src>

<mosaic_0001>
module attributes {stable_mosaic.version = 11 : i64} {
  func.func @_mhc_fused_kernel(%arg0: i32, %arg1: memref<2x16x4xf32, #tpu.memory_space<vmem>>, %arg2: memref<12x128xf32, #tpu.memory_space<vmem>>, %arg3: memref<1x128xf32, #tpu.memory_space<vmem>>, %arg4: memref<384x128xf32, #tpu.memory_space<vmem>>, %arg5: memref<1x128xf32, #tpu.memory_space<vmem>>, %arg6: memref<384x128xf32, #tpu.memory_space<vmem>>, %arg7: memref<1x128xf32, #tpu.memory_space<vmem>>, %arg8: memref<384x128xf32, #tpu.memory_space<vmem>>, %arg9: memref<1x128xf32, #tpu.memory_space<vmem>>, %arg10: memref<2x1x128xf32, #tpu.memory_space<vmem>>) attributes {dimension_semantics = [#tpu.dimension_semantics<parallel>], iteration_bounds = array<i64: 1>, scalar_prefetch = 0 : i64, scratch_operands = 0 : i64, tpu.core_type = #tpu.core_type<tc>, window_params = [{transform_indices = @transform_0, window_bounds = array<i64: 2, 16, 4>}, {pipeline_mode = #tpu.pipeline_mode<synchronous>, transform_indices = @transform_1, window_bounds = array<i64: 12, 128>}, {pipeline_mode = #tpu.pipeline_mode<synchronous>, transform_indices = @transform_2, window_bounds = array<i64: 1, 128>}, {pipeline_mode = #tpu.pipeline_mode<synchronous>, transform_indices = @transform_3, window_bounds = array<i64: 384, 128>}, {pipeline_mode = #tpu.pipeline_mode<synchronous>, transform_indices = @transform_4, window_bounds = array<i64: 1, 128>}, {pipeline_mode = #tpu.pipeline_mode<synchronous>, transform_indices = @transform_5, window_bounds = array<i64: 384, 128>}, {pipeline_mode = #tpu.pipeline_mode<synchronous>, transform_indices = @transform_6, window_bounds = array<i64: 1, 128>}, {pipeline_mode = #tpu.pipeline_mode<synchronous>, transform_indices = @transform_7, window_bounds = array<i64: 384, 128>}, {pipeline_mode = #tpu.pipeline_mode<synchronous>, transform_indices = @transform_8, window_bounds = array<i64: 1, 128>}, {transform_indices = @transform_9, window_bounds = array<i64: 2, 1, 128>}]} {
    %c0 = arith.constant 0 : index
    %c0_0 = arith.constant 0 : index
    %c0_1 = arith.constant 0 : index
    %0 = vector.load %arg1[%c0, %c0_0, %c0_1] : memref<2x16x4xf32, #tpu.memory_space<vmem>>, vector<1x16x4xf32>
    %1 = vector.shape_cast %0 : vector<1x16x4xf32> to vector<16x4xf32>
    %cst = arith.constant 0.000000e+00 : f32
    %2 = vector.broadcast %cst : f32 to vector<1x4xf32>
    %3 = tpu.concatenate %2, %1, %2 in 0 : vector<1x4xf32>, vector<16x4xf32>, vector<1x4xf32> -> vector<18x4xf32>
    %c0_2 = arith.constant 0 : index
    %c0_3 = arith.constant 0 : index
    %4 = vector.load %arg2[%c0_2, %c0_3] : memref<12x128xf32, #tpu.memory_space<vmem>>, vector<12x128xf32>
    %cst_4 = arith.constant 0.000000e+00 : f32
    %5 = vector.broadcast %cst_4 : f32 to vector<16x128xf32>
    %6 = vector.extract_strided_slice %3 {offsets = [0, 0], sizes = [16, 4], strides = [1, 1]} : vector<18x4xf32> to vector<16x4xf32>
    %7 = vector.extract_strided_slice %6 {offsets = [0, 0], sizes = [16, 1], strides = [1, 1]} : vector<16x4xf32> to vector<16x1xf32>
    %8 = vector.extract_strided_slice %4 {offsets = [0, 0], sizes = [1, 128], strides = [1, 1]} : vector<12x128xf32> to vector<1x128xf32>
    %9 = vector.broadcast %7 : vector<16x1xf32> to vector<16x128xf32>
    %10 = vector.broadcast %8 : vector<1x128xf32> to vector<16x128xf32>
    %11 = arith.mulf %9, %10 : vector<16x128xf32>
    %12 = arith.addf %5, %11 : vector<16x128xf32>
    %13 = vector.extract_strided_slice %6 {offsets = [0, 1], sizes = [16, 1], strides = [1, 1]} : vector<16x4xf32> to vector<16x1xf32>
    %14 = vector.extract_strided_slice %4 {offsets = [1, 0], sizes = [1, 128], strides = [1, 1]} : vector<12x128xf32> to vector<1x128xf32>
    %15 = vector.broadcast %13 : vector<16x1xf32> to vector<16x128xf32>
    %16 = vector.broadcast %14 : vector<1x128xf32> to vector<16x128xf32>
    %17 = arith.mulf %15, %16 : vector<16x128xf32>
    %18 = arith.addf %12, %17 : vector<16x128xf32>
    %19 = vector.extract_strided_slice %6 {offsets = [0, 2], sizes = [16, 1], strides = [1, 1]} : vector<16x4xf32> to vector<16x1xf32>
    %20 = vector.extract_strided_slice %4 {offsets = [2, 0], sizes = [1, 128], strides = [1, 1]} : vector<12x128xf32> to vector<1x128xf32>
    %21 = vector.broadcast %19 : vector<16x1xf32> to vector<16x128xf32>
    %22 = vector.broadcast %20 : vector<1x128xf32> to vector<16x128xf32>
    %23 = arith.mulf %21, %22 : vector<16x128xf32>
    %24 = arith.addf %18, %23 : vector<16x128xf32>
    %25 = vector.extract_strided_slice %6 {offsets = [0, 3], sizes = [16, 1], strides = [1, 1]} : vector<16x4xf32> to vector<16x1xf32>
    %26 = vector.extract_strided_slice %4 {offsets = [3, 0], sizes = [1, 128], strides = [1, 1]} : vector<12x128xf32> to vector<1x128xf32>
    %27 = vector.broadcast %25 : vector<16x1xf32> to vector<16x128xf32>
    %28 = vector.broadcast %26 : vector<1x128xf32> to vector<16x128xf32>
    %29 = arith.mulf %27, %28 : vector<16x128xf32>
    %30 = arith.addf %24, %29 : vector<16x128xf32>
    %31 = vector.extract_strided_slice %3 {offsets = [1, 0], sizes = [16, 4], strides = [1, 1]} : vector<18x4xf32> to vector<16x4xf32>
    %32 = vector.extract_strided_slice %31 {offsets = [0, 0], sizes = [16, 1], strides = [1, 1]} : vector<16x4xf32> to vector<16x1xf32>
    %33 = vector.extract_strided_slice %4 {offsets = [4, 0], sizes = [1, 128], strides = [1, 1]} : vector<12x128xf32> to vector<1x128xf32>
    %34 = vector.broadcast %32 : vector<16x1xf32> to vector<16x128xf32>
    %35 = vector.broadcast %33 : vector<1x128xf32> to vector<16x128xf32>
    %36 = arith.mulf %34, %35 : vector<16x128xf32>
    %37 = arith.addf %30, %36 : vector<16x128xf32>
    %38 = vector.extract_strided_slice %31 {offsets = [0, 1], sizes = [16, 1], strides = [1, 1]} : vector<16x4xf32> to vector<16x1xf32>
    %39 = vector.extract_strided_slice %4 {offsets = [5, 0], sizes = [1, 128], strides = [1, 1]} : vector<12x128xf32> to vector<1x128xf32>
    %40 = vector.broadcast %38 : vector<16x1xf32> to vector<16x128xf32>
    %41 = vector.broadcast %39 : vector<1x128xf32> to vector<16x128xf32>
    %42 = arith.mulf %40, %41 : vector<16x128xf32>
    %43 = arith.addf %37, %42 : vector<16x128xf32>
    %44 = vector.extract_strided_slice %31 {offsets = [0, 2], sizes = [16, 1], strides = [1, 1]} : vector<16x4xf32> to vector<16x1xf32>
    %45 = vector.extract_strided_slice %4 {offsets = [6, 0], sizes = [1, 128], strides = [1, 1]} : vector<12x128xf32> to vector<1x128xf32>
    %46 = vector.broadcast %44 : vector<16x1xf32> to vector<16x128xf32>
    %47 = vector.broadcast %45 : vector<1x128xf32> to vector<16x128xf32>
    %48 = arith.mulf %46, %47 : vector<16x128xf32>
    %49 = arith.addf %43, %48 : vector<16x128xf32>
    %50 = vector.extract_strided_slice %31 {offsets = [0, 3], sizes = [16, 1], strides = [1, 1]} : vector<16x4xf32> to vector<16x1xf32>
    %51 = vector.extract_strided_slice %4 {offsets = [7, 0], sizes = [1, 128], strides = [1, 1]} : vector<12x128xf32> to vector<1x128xf32>
    %52 = vector.broadcast %50 : vector<16x1xf32> to vector<16x128xf32>
    %53 = vector.broadcast %51 : vector<1x128xf32> to vector<16x128xf32>
    %54 = arith.mulf %52, %53 : vector<16x128xf32>
    %55 = arith.addf %49, %54 : vector<16x128xf32>
    %56 = vector.extract_strided_slice %3 {offsets = [2, 0], sizes = [16, 4], strides = [1, 1]} : vector<18x4xf32> to vector<16x4xf32>
    %57 = vector.extract_strided_slice %56 {offsets = [0, 0], sizes = [16, 1], strides = [1, 1]} : vector<16x4xf32> to vector<16x1xf32>
    %58 = vector.extract_strided_slice %4 {offsets = [8, 0], sizes = [1, 128], strides = [1, 1]} : vector<12x128xf32> to vector<1x128xf32>
    %59 = vector.broadcast %57 : vector<16x1xf32> to vector<16x128xf32>
    %60 = vector.broadcast %58 : vector<1x128xf32> to vector<16x128xf32>
    %61 = arith.mulf %59, %60 : vector<16x128xf32>
    %62 = arith.addf %55, %61 : vector<16x128xf32>
    %63 = vector.extract_strided_slice %56 {offsets = [0, 1], sizes = [16, 1], strides = [1, 1]} : vector<16x4xf32> to vector<16x1xf32>
    %64 = vector.extract_strided_slice %4 {offsets = [9, 0], sizes = [1, 128], strides = [1, 1]} : vector<12x128xf32> to vector<1x128xf32>
    %65 = vector.broadcast %63 : vector<16x1xf32> to vector<16x128xf32>
    %66 = vector.broadcast %64 : vector<1x128xf32> to vector<16x128xf32>
    %67 = arith.mulf %65, %66 : vector<16x128xf32>
    %68 = arith.addf %62, %67 : vector<16x128xf32>
    %69 = vector.extract_strided_slice %56 {offsets = [0, 2], sizes = [16, 1], strides = [1, 1]} : vector<16x4xf32> to vector<16x1xf32>
    %70 = vector.extract_strided_slice %4 {offsets = [10, 0], sizes = [1, 128], strides = [1, 1]} : vector<12x128xf32> to vector<1x128xf32>
    %71 = vector.broadcast %69 : vector<16x1xf32> to vector<16x128xf32>
    %72 = vector.broadcast %70 : vector<1x128xf32> to vector<16x128xf32>
    %73 = arith.mulf %71, %72 : vector<16x128xf32>
    %74 = arith.addf %68, %73 : vector<16x128xf32>
    %75 = vector.extract_strided_slice %56 {offsets = [0, 3], sizes = [16, 1], strides = [1, 1]} : vector<16x4xf32> to vector<16x1xf32>
    %76 = vector.extract_strided_slice %4 {offsets = [11, 0], sizes = [1, 128], strides = [1, 1]} : vector<12x128xf32> to vector<1x128xf32>
    %77 = vector.broadcast %75 : vector<16x1xf32> to vector<16x128xf32>
    %78 = vector.broadcast %76 : vector<1x128xf32> to vector<16x128xf32>
    %79 = arith.mulf %77, %78 : vector<16x128xf32>
    %80 = arith.addf %74, %79 : vector<16x128xf32>
    %c0_5 = arith.constant 0 : index
    %c0_6 = arith.constant 0 : index
    %81 = vector.load %arg3[%c0_5, %c0_6] : memref<1x128xf32, #tpu.memory_space<vmem>>, vector<1x128xf32>
    %82 = vector.broadcast %81 : vector<1x128xf32> to vector<16x128xf32>
    %83 = arith.addf %80, %82 : vector<16x128xf32>
    %cst_7 = arith.constant 0.000000e+00 : f32
    %84 = vector.broadcast %cst_7 : f32 to vector<16x128xf32>
    %85 = arith.maximumf %83, %84 : vector<16x128xf32>
    %cst_8 = arith.constant 0xFF800000 : f32
    %86 = vector.broadcast %cst_8 : f32 to vector<1x128xf32>
    %87 = tpu.concatenate %86, %85, %86 in 0 : vector<1x128xf32>, vector<16x128xf32>, vector<1x128xf32> -> vector<18x128xf32>
    %88 = vector.extract_strided_slice %87 {offsets = [0, 0], sizes = [16, 128], strides = [1, 1]} : vector<18x128xf32> to vector<16x128xf32>
    %89 = vector.extract_strided_slice %87 {offsets = [1, 0], sizes = [16, 128], strides = [1, 1]} : vector<18x128xf32> to vector<16x128xf32>
    %90 = arith.maximumf %88, %89 : vector<16x128xf32>
    %91 = vector.extract_strided_slice %87 {offsets = [2, 0], sizes = [16, 128], strides = [1, 1]} : vector<18x128xf32> to vector<16x128xf32>
    %92 = arith.maximumf %90, %91 : vector<16x128xf32>
    %cst_9 = arith.constant 0.000000e+00 : f32
    %93 = vector.broadcast %cst_9 : f32 to vector<1x128xf32>
    %94 = tpu.concatenate %93, %92, %93 in 0 : vector<1x128xf32>, vector<16x128xf32>, vector<1x128xf32> -> vector<18x128xf32>
    %95 = vector.extract_strided_slice %94 {offsets = [0, 0], sizes = [16, 128], strides = [1, 1]} : vector<18x128xf32> to vector<16x128xf32>
    %96 = vector.extract_strided_slice %94 {offsets = [1, 0], sizes = [16, 128], strides = [1, 1]} : vector<18x128xf32> to vector<16x128xf32>
    %97 = vector.extract_strided_slice %94 {offsets = [2, 0], sizes = [16, 128], strides = [1, 1]} : vector<18x128xf32> to vector<16x128xf32>
    %98 = tpu.concatenate %95, %96, %97 in 1 : vector<16x128xf32>, vector<16x128xf32>, vector<16x128xf32> -> vector<16x384xf32>
    %c0_10 = arith.constant 0 : index
    %c0_11 = arith.constant 0 : index
    %99 = vector.load %arg4[%c0_10, %c0_11] : memref<384x128xf32, #tpu.memory_space<vmem>>, vector<384x128xf32>
    %cst_12 = arith.constant dense<0.000000e+00> : vector<16x128xf32>
    %100 = tpu.matmul %98, %99, %cst_12 {dimension_numbers = #tpu.dot_dimension_numbers<[1], [0], [0], [1], [0, 0, 1, 1], [], []>} : vector<16x384xf32>, vector<384x128xf32>, vector<16x128xf32> -> vector<16x128xf32>
    %c0_13 = arith.constant 0 : index
    %c0_14 = arith.constant 0 : index
    %101 = vector.load %arg5[%c0_13, %c0_14] : memref<1x128xf32, #tpu.memory_space<vmem>>, vector<1x128xf32>
    %102 = vector.broadcast %101 : vector<1x128xf32> to vector<16x128xf32>
    %103 = arith.addf %100, %102 : vector<16x128xf32>
    %cst_15 = arith.constant 0.000000e+00 : f32
    %104 = vector.broadcast %cst_15 : f32 to vector<16x128xf32>
    %105 = arith.maximumf %103, %104 : vector<16x128xf32>
    %106 = vector.extract_strided_slice %105 {offsets = [0, 0], sizes = [12, 128], strides = [1, 1]} : vector<16x128xf32> to vector<12x128xf32>
    %107 = vector.extract_strided_slice %105 {offsets = [1, 0], sizes = [12, 128], strides = [1, 1]} : vector<16x128xf32> to vector<12x128xf32>
    %108 = arith.maximumf %106, %107 : vector<12x128xf32>
    %109 = vector.extract_strided_slice %105 {offsets = [2, 0], sizes = [12, 128], strides = [1, 1]} : vector<16x128xf32> to vector<12x128xf32>
    %110 = arith.maximumf %108, %109 : vector<12x128xf32>
    %111 = vector.extract_strided_slice %105 {offsets = [3, 0], sizes = [12, 128], strides = [1, 1]} : vector<16x128xf32> to vector<12x128xf32>
    %112 = arith.maximumf %110, %111 : vector<12x128xf32>
    %113 = vector.extract_strided_slice %105 {offsets = [4, 0], sizes = [12, 128], strides = [1, 1]} : vector<16x128xf32> to vector<12x128xf32>
    %114 = arith.maximumf %112, %113 : vector<12x128xf32>
    %115 = vector.extract_strided_slice %114 {offsets = [0, 0], sizes = [1, 128], strides = [1, 1]} : vector<12x128xf32> to vector<1x128xf32>
    %116 = vector.extract_strided_slice %114 {offsets = [3, 0], sizes = [1, 128], strides = [1, 1]} : vector<12x128xf32> to vector<1x128xf32>
    %117 = vector.extract_strided_slice %114 {offsets = [6, 0], sizes = [1, 128], strides = [1, 1]} : vector<12x128xf32> to vector<1x128xf32>
    %118 = vector.extract_strided_slice %114 {offsets = [9, 0], sizes = [1, 128], strides = [1, 1]} : vector<12x128xf32> to vector<1x128xf32>
    %119 = tpu.concatenate %115, %116, %117, %118 in 0 : vector<1x128xf32>, vector<1x128xf32>, vector<1x128xf32>, vector<1x128xf32> -> vector<4x128xf32>
    %cst_16 = arith.constant 0.000000e+00 : f32
    %120 = vector.broadcast %cst_16 : f32 to vector<1x128xf32>
    %121 = tpu.concatenate %120, %119, %120 in 0 : vector<1x128xf32>, vector<4x128xf32>, vector<1x128xf32> -> vector<6x128xf32>
    %122 = vector.extract_strided_slice %121 {offsets = [0, 0], sizes = [4, 128], strides = [1, 1]} : vector<6x128xf32> to vector<4x128xf32>
    %123 = vector.extract_strided_slice %121 {offsets = [1, 0], sizes = [4, 128], strides = [1, 1]} : vector<6x128xf32> to vector<4x128xf32>
    %124 = vector.extract_strided_slice %121 {offsets = [2, 0], sizes = [4, 128], strides = [1, 1]} : vector<6x128xf32> to vector<4x128xf32>
    %125 = tpu.concatenate %122, %123, %124 in 1 : vector<4x128xf32>, vector<4x128xf32>, vector<4x128xf32> -> vector<4x384xf32>
    %c0_17 = arith.constant 0 : index
    %c0_18 = arith.constant 0 : index
    %126 = vector.load %arg6[%c0_17, %c0_18] : memref<384x128xf32, #tpu.memory_space<vmem>>, vector<384x128xf32>
    %cst_19 = arith.constant dense<0.000000e+00> : vector<4x128xf32>
    %127 = tpu.matmul %125, %126, %cst_19 {dimension_numbers = #tpu.dot_dimension_numbers<[1], [0], [0], [1], [0, 0, 1, 1], [], []>} : vector<4x384xf32>, vector<384x128xf32>, vector<4x128xf32> -> vector<4x128xf32>
    %c0_20 = arith.constant 0 : index
    %c0_21 = arith.constant 0 : index
    %128 = vector.load %arg7[%c0_20, %c0_21] : memref<1x128xf32, #tpu.memory_space<vmem>>, vector<1x128xf32>
    %129 = vector.broadcast %128 : vector<1x128xf32> to vector<4x128xf32>
    %130 = arith.addf %127, %129 : vector<4x128xf32>
    %cst_22 = arith.constant 0.000000e+00 : f32
    %131 = vector.broadcast %cst_22 : f32 to vector<4x128xf32>
    %132 = arith.maximumf %130, %131 : vector<4x128xf32>
    %cst_23 = arith.constant 0xFF800000 : f32
    %133 = vector.broadcast %cst_23 : f32 to vector<1x128xf32>
    %134 = tpu.concatenate %133, %132, %133 in 0 : vector<1x128xf32>, vector<4x128xf32>, vector<1x128xf32> -> vector<6x128xf32>
    %135 = vector.extract_strided_slice %134 {offsets = [0, 0], sizes = [3, 128], strides = [1, 1]} : vector<6x128xf32> to vector<3x128xf32>
    %136 = vector.extract_strided_slice %134 {offsets = [1, 0], sizes = [3, 128], strides = [1, 1]} : vector<6x128xf32> to vector<3x128xf32>
    %137 = arith.maximumf %135, %136 : vector<3x128xf32>
    %138 = vector.extract_strided_slice %134 {offsets = [2, 0], sizes = [3, 128], strides = [1, 1]} : vector<6x128xf32> to vector<3x128xf32>
    %139 = arith.maximumf %137, %138 : vector<3x128xf32>
    %140 = vector.extract_strided_slice %134 {offsets = [3, 0], sizes = [3, 128], strides = [1, 1]} : vector<6x128xf32> to vector<3x128xf32>
    %141 = arith.maximumf %139, %140 : vector<3x128xf32>
    %142 = vector.extract_strided_slice %141 {offsets = [0, 0], sizes = [1, 128], strides = [1, 1]} : vector<3x128xf32> to vector<1x128xf32>
    %143 = vector.extract_strided_slice %141 {offsets = [2, 0], sizes = [1, 128], strides = [1, 1]} : vector<3x128xf32> to vector<1x128xf32>
    %144 = tpu.concatenate %142, %143 in 0 : vector<1x128xf32>, vector<1x128xf32> -> vector<2x128xf32>
    %cst_24 = arith.constant 0.000000e+00 : f32
    %145 = vector.broadcast %cst_24 : f32 to vector<1x128xf32>
    %146 = tpu.concatenate %145, %144, %145 in 0 : vector<1x128xf32>, vector<2x128xf32>, vector<1x128xf32> -> vector<4x128xf32>
    %147 = vector.extract_strided_slice %146 {offsets = [0, 0], sizes = [2, 128], strides = [1, 1]} : vector<4x128xf32> to vector<2x128xf32>
    %148 = vector.extract_strided_slice %146 {offsets = [1, 0], sizes = [2, 128], strides = [1, 1]} : vector<4x128xf32> to vector<2x128xf32>
    %149 = vector.extract_strided_slice %146 {offsets = [2, 0], sizes = [2, 128], strides = [1, 1]} : vector<4x128xf32> to vector<2x128xf32>
    %150 = tpu.concatenate %147, %148, %149 in 1 : vector<2x128xf32>, vector<2x128xf32>, vector<2x128xf32> -> vector<2x384xf32>
    %c0_25 = arith.constant 0 : index
    %c0_26 = arith.constant 0 : index
    %151 = vector.load %arg8[%c0_25, %c0_26] : memref<384x128xf32, #tpu.memory_space<vmem>>, vector<384x128xf32>
    %cst_27 = arith.constant dense<0.000000e+00> : vector<2x128xf32>
    %152 = tpu.matmul %150, %151, %cst_27 {dimension_numbers = #tpu.dot_dimension_numbers<[1], [0], [0], [1], [0, 0, 1, 1], [], []>} : vector<2x384xf32>, vector<384x128xf32>, vector<2x128xf32> -> vector<2x128xf32>
    %c0_28 = arith.constant 0 : index
    %c0_29 = arith.constant 0 : index
    %153 = vector.load %arg9[%c0_28, %c0_29] : memref<1x128xf32, #tpu.memory_space<vmem>>, vector<1x128xf32>
    %154 = vector.broadcast %153 : vector<1x128xf32> to vector<2x128xf32>
    %155 = arith.addf %152, %154 : vector<2x128xf32>
    %cst_30 = arith.constant 0.000000e+00 : f32
    %156 = vector.broadcast %cst_30 : f32 to vector<2x128xf32>
    %157 = arith.maximumf %155, %156 : vector<2x128xf32>
    %cst_31 = arith.constant 0xFF800000 : f32
    %158 = vector.broadcast %cst_31 : f32 to vector<1x128xf32>
    %159 = tpu.concatenate %158, %157, %158 in 0 : vector<1x128xf32>, vector<2x128xf32>, vector<1x128xf32> -> vector<4x128xf32>
    %160 = vector.extract_strided_slice %159 {offsets = [0, 0], sizes = [1, 128], strides = [1, 1]} : vector<4x128xf32> to vector<1x128xf32>
    %161 = vector.extract_strided_slice %159 {offsets = [1, 0], sizes = [1, 128], strides = [1, 1]} : vector<4x128xf32> to vector<1x128xf32>
    %162 = arith.maximumf %160, %161 : vector<1x128xf32>
    %163 = vector.extract_strided_slice %159 {offsets = [2, 0], sizes = [1, 128], strides = [1, 1]} : vector<4x128xf32> to vector<1x128xf32>
    %164 = arith.maximumf %162, %163 : vector<1x128xf32>
    %165 = vector.extract_strided_slice %159 {offsets = [3, 0], sizes = [1, 128], strides = [1, 1]} : vector<4x128xf32> to vector<1x128xf32>
    %166 = arith.maximumf %164, %165 : vector<1x128xf32>
    %c0_32 = arith.constant 0 : index
    %c0_33 = arith.constant 0 : index
    %c0_34 = arith.constant 0 : index
    %167 = vector.load %arg10[%c0_32, %c0_33, %c0_34] : memref<2x1x128xf32, #tpu.memory_space<vmem>>, vector<1x1x128xf32>
    %168 = vector.shape_cast %167 : vector<1x1x128xf32> to vector<1x128xf32>
    %169 = vector.shape_cast %166 : vector<1x128xf32> to vector<1x1x128xf32>
    tpu.vector_store %arg10[%c0_32, %c0_33, %c0_34], %169 {strides = array<i32>} : memref<2x1x128xf32, #tpu.memory_space<vmem>>, vector<1x1x128xf32>,
    %c1 = arith.constant 1 : index
    %c0_35 = arith.constant 0 : index
    %c0_36 = arith.constant 0 : index
    %170 = vector.load %arg1[%c1, %c0_35, %c0_36] : memref<2x16x4xf32, #tpu.memory_space<vmem>>, vector<1x16x4xf32>
    %171 = vector.shape_cast %170 : vector<1x16x4xf32> to vector<16x4xf32>
    %cst_37 = arith.constant 0.000000e+00 : f32
    %172 = vector.broadcast %cst_37 : f32 to vector<1x4xf32>
    %173 = tpu.concatenate %172, %171, %172 in 0 : vector<1x4xf32>, vector<16x4xf32>, vector<1x4xf32> -> vector<18x4xf32>
    %c0_38 = arith.constant 0 : index
    %c0_39 = arith.constant 0 : index
    %174 = vector.load %arg2[%c0_38, %c0_39] : memref<12x128xf32, #tpu.memory_space<vmem>>, vector<12x128xf32>
    %cst_40 = arith.constant 0.000000e+00 : f32
    %175 = vector.broadcast %cst_40 : f32 to vector<16x128xf32>
    %176 = vector.extract_strided_slice %173 {offsets = [0, 0], sizes = [16, 4], strides = [1, 1]} : vector<18x4xf32> to vector<16x4xf32>
    %177 = vector.extract_strided_slice %176 {offsets = [0, 0], sizes = [16, 1], strides = [1, 1]} : vector<16x4xf32> to vector<16x1xf32>
    %178 = vector.extract_strided_slice %174 {offsets = [0, 0], sizes = [1, 128], strides = [1, 1]} : vector<12x128xf32> to vector<1x128xf32>
    %179 = vector.broadcast %177 : vector<16x1xf32> to vector<16x128xf32>
    %180 = vector.broadcast %178 : vector<1x128xf32> to vector<16x128xf32>
    %181 = arith.mulf %179, %180 : vector<16x128xf32>
    %182 = arith.addf %175, %181 : vector<16x128xf32>
    %183 = vector.extract_strided_slice %176 {offsets = [0, 1], sizes = [16, 1], strides = [1, 1]} : vector<16x4xf32> to vector<16x1xf32>
    %184 = vector.extract_strided_slice %174 {offsets = [1, 0], sizes = [1, 128], strides = [1, 1]} : vector<12x128xf32> to vector<1x128xf32>
    %185 = vector.broadcast %183 : vector<16x1xf32> to vector<16x128xf32>
    %186 = vector.broadcast %184 : vector<1x128xf32> to vector<16x128xf32>
    %187 = arith.mulf %185, %186 : vector<16x128xf32>
    %188 = arith.addf %182, %187 : vector<16x128xf32>
    %189 = vector.extract_strided_slice %176 {offsets = [0, 2], sizes = [16, 1], strides = [1, 1]} : vector<16x4xf32> to vector<16x1xf32>
    %190 = vector.extract_strided_slice %174 {offsets = [2, 0], sizes = [1, 128], strides = [1, 1]} : vector<12x128xf32> to vector<1x128xf32>
    %191 = vector.broadcast %189 : vector<16x1xf32> to vector<16x128xf32>
    %192 = vector.broadcast %190 : vector<1x128xf32> to vector<16x128xf32>
    %193 = arith.mulf %191, %192 : vector<16x128xf32>
    %194 = arith.addf %188, %193 : vector<16x128xf32>
    %195 = vector.extract_strided_slice %176 {offsets = [0, 3], sizes = [16, 1], strides = [1, 1]} : vector<16x4xf32> to vector<16x1xf32>
    %196 = vector.extract_strided_slice %174 {offsets = [3, 0], sizes = [1, 128], strides = [1, 1]} : vector<12x128xf32> to vector<1x128xf32>
    %197 = vector.broadcast %195 : vector<16x1xf32> to vector<16x128xf32>
    %198 = vector.broadcast %196 : vector<1x128xf32> to vector<16x128xf32>
    %199 = arith.mulf %197, %198 : vector<16x128xf32>
    %200 = arith.addf %194, %199 : vector<16x128xf32>
    %201 = vector.extract_strided_slice %173 {offsets = [1, 0], sizes = [16, 4], strides = [1, 1]} : vector<18x4xf32> to vector<16x4xf32>
    %202 = vector.extract_strided_slice %201 {offsets = [0, 0], sizes = [16, 1], strides = [1, 1]} : vector<16x4xf32> to vector<16x1xf32>
    %203 = vector.extract_strided_slice %174 {offsets = [4, 0], sizes = [1, 128], strides = [1, 1]} : vector<12x128xf32> to vector<1x128xf32>
    %204 = vector.broadcast %202 : vector<16x1xf32> to vector<16x128xf32>
    %205 = vector.broadcast %203 : vector<1x128xf32> to vector<16x128xf32>
    %206 = arith.mulf %204, %205 : vector<16x128xf32>
    %207 = arith.addf %200, %206 : vector<16x128xf32>
    %208 = vector.extract_strided_slice %201 {offsets = [0, 1], sizes = [16, 1], strides = [1, 1]} : vector<16x4xf32> to vector<16x1xf32>
    %209 = vector.extract_strided_slice %174 {offsets = [5, 0], sizes = [1, 128], strides = [1, 1]} : vector<12x128xf32> to vector<1x128xf32>
    %210 = vector.broadcast %208 : vector<16x1xf32> to vector<16x128xf32>
    %211 = vector.broadcast %209 : vector<1x128xf32> to vector<16x128xf32>
    %212 = arith.mulf %210, %211 : vector<16x128xf32>
    %213 = arith.addf %207, %212 : vector<16x128xf32>
    %214 = vector.extract_strided_slice %201 {offsets = [0, 2], sizes = [16, 1], strides = [1, 1]} : vector<16x4xf32> to vector<16x1xf32>
    %215 = vector.extract_strided_slice %174 {offsets = [6, 0], sizes = [1, 128], strides = [1, 1]} : vector<12x128xf32> to vector<1x128xf32>
    %216 = vector.broadcast %214 : vector<16x1xf32> to vector<16x128xf32>
    %217 = vector.broadcast %215 : vector<1x128xf32> to vector<16x128xf32>
    %218 = arith.mulf %216, %217 : vector<16x128xf32>
    %219 = arith.addf %213, %218 : vector<16x128xf32>
    %220 = vector.extract_strided_slice %201 {offsets = [0, 3], sizes = [16, 1], strides = [1, 1]} : vector<16x4xf32> to vector<16x1xf32>
    %221 = vector.extract_strided_slice %174 {offsets = [7, 0], sizes = [1, 128], strides = [1, 1]} : vector<12x128xf32> to vector<1x128xf32>
    %222 = vector.broadcast %220 : vector<16x1xf32> to vector<16x128xf32>
    %223 = vector.broadcast %221 : vector<1x128xf32> to vector<16x128xf32>
    %224 = arith.mulf %222, %223 : vector<16x128xf32>
    %225 = arith.addf %219, %224 : vector<16x128xf32>
    %226 = vector.extract_strided_slice %173 {offsets = [2, 0], sizes = [16, 4], strides = [1, 1]} : vector<18x4xf32> to vector<16x4xf32>
    %227 = vector.extract_strided_slice %226 {offsets = [0, 0], sizes = [16, 1], strides = [1, 1]} : vector<16x4xf32> to vector<16x1xf32>
    %228 = vector.extract_strided_slice %174 {offsets = [8, 0], sizes = [1, 128], strides = [1, 1]} : vector<12x128xf32> to vector<1x128xf32>
    %229 = vector.broadcast %227 : vector<16x1xf32> to vector<16x128xf32>
    %230 = vector.broadcast %228 : vector<1x128xf32> to vector<16x128xf32>
    %231 = arith.mulf %229, %230 : vector<16x128xf32>
    %232 = arith.addf %225, %231 : vector<16x128xf32>
    %233 = vector.extract_strided_slice %226 {offsets = [0, 1], sizes = [16, 1], strides = [1, 1]} : vector<16x4xf32> to vector<16x1xf32>
    %234 = vector.extract_strided_slice %174 {offsets = [9, 0], sizes = [1, 128], strides = [1, 1]} : vector<12x128xf32> to vector<1x128xf32>
    %235 = vector.broadcast %233 : vector<16x1xf32> to vector<16x128xf32>
    %236 = vector.broadcast %234 : vector<1x128xf32> to vector<16x128xf32>
    %237 = arith.mulf %235, %236 : vector<16x128xf32>
    %238 = arith.addf %232, %237 : vector<16x128xf32>
    %239 = vector.extract_strided_slice %226 {offsets = [0, 2], sizes = [16, 1], strides = [1, 1]} : vector<16x4xf32> to vector<16x1xf32>
    %240 = vector.extract_strided_slice %174 {offsets = [10, 0], sizes = [1, 128], strides = [1, 1]} : vector<12x128xf32> to vector<1x128xf32>
    %241 = vector.broadcast %239 : vector<16x1xf32> to vector<16x128xf32>
    %242 = vector.broadcast %240 : vector<1x128xf32> to vector<16x128xf32>
    %243 = arith.mulf %241, %242 : vector<16x128xf32>
    %244 = arith.addf %238, %243 : vector<16x128xf32>
    %245 = vector.extract_strided_slice %226 {offsets = [0, 3], sizes = [16, 1], strides = [1, 1]} : vector<16x4xf32> to vector<16x1xf32>
    %246 = vector.extract_strided_slice %174 {offsets = [11, 0], sizes = [1, 128], strides = [1, 1]} : vector<12x128xf32> to vector<1x128xf32>
    %247 = vector.broadcast %245 : vector<16x1xf32> to vector<16x128xf32>
    %248 = vector.broadcast %246 : vector<1x128xf32> to vector<16x128xf32>
    %249 = arith.mulf %247, %248 : vector<16x128xf32>
    %250 = arith.addf %244, %249 : vector<16x128xf32>
    %c0_41 = arith.constant 0 : index
    %c0_42 = arith.constant 0 : index
    %251 = vector.load %arg3[%c0_41, %c0_42] : memref<1x128xf32, #tpu.memory_space<vmem>>, vector<1x128xf32>
    %252 = vector.broadcast %251 : vector<1x128xf32> to vector<16x128xf32>
    %253 = arith.addf %250, %252 : vector<16x128xf32>
    %cst_43 = arith.constant 0.000000e+00 : f32
    %254 = vector.broadcast %cst_43 : f32 to vector<16x128xf32>
    %255 = arith.maximumf %253, %254 : vector<16x128xf32>
    %cst_44 = arith.constant 0xFF800000 : f32
    %256 = vector.broadcast %cst_44 : f32 to vector<1x128xf32>
    %257 = tpu.concatenate %256, %255, %256 in 0 : vector<1x128xf32>, vector<16x128xf32>, vector<1x128xf32> -> vector<18x128xf32>
    %258 = vector.extract_strided_slice %257 {offsets = [0, 0], sizes = [16, 128], strides = [1, 1]} : vector<18x128xf32> to vector<16x128xf32>
    %259 = vector.extract_strided_slice %257 {offsets = [1, 0], sizes = [16, 128], strides = [1, 1]} : vector<18x128xf32> to vector<16x128xf32>
    %260 = arith.maximumf %258, %259 : vector<16x128xf32>
    %261 = vector.extract_strided_slice %257 {offsets = [2, 0], sizes = [16, 128], strides = [1, 1]} : vector<18x128xf32> to vector<16x128xf32>
    %262 = arith.maximumf %260, %261 : vector<16x128xf32>
    %cst_45 = arith.constant 0.000000e+00 : f32
    %263 = vector.broadcast %cst_45 : f32 to vector<1x128xf32>
    %264 = tpu.concatenate %263, %262, %263 in 0 : vector<1x128xf32>, vector<16x128xf32>, vector<1x128xf32> -> vector<18x128xf32>
    %265 = vector.extract_strided_slice %264 {offsets = [0, 0], sizes = [16, 128], strides = [1, 1]} : vector<18x128xf32> to vector<16x128xf32>
    %266 = vector.extract_strided_slice %264 {offsets = [1, 0], sizes = [16, 128], strides = [1, 1]} : vector<18x128xf32> to vector<16x128xf32>
    %267 = vector.extract_strided_slice %264 {offsets = [2, 0], sizes = [16, 128], strides = [1, 1]} : vector<18x128xf32> to vector<16x128xf32>
    %268 = tpu.concatenate %265, %266, %267 in 1 : vector<16x128xf32>, vector<16x128xf32>, vector<16x128xf32> -> vector<16x384xf32>
    %c0_46 = arith.constant 0 : index
    %c0_47 = arith.constant 0 : index
    %269 = vector.load %arg4[%c0_46, %c0_47] : memref<384x128xf32, #tpu.memory_space<vmem>>, vector<384x128xf32>
    %cst_48 = arith.constant dense<0.000000e+00> : vector<16x128xf32>
    %270 = tpu.matmul %268, %269, %cst_48 {dimension_numbers = #tpu.dot_dimension_numbers<[1], [0], [0], [1], [0, 0, 1, 1], [], []>} : vector<16x384xf32>, vector<384x128xf32>, vector<16x128xf32> -> vector<16x128xf32>
    %c0_49 = arith.constant 0 : index
    %c0_50 = arith.constant 0 : index
    %271 = vector.load %arg5[%c0_49, %c0_50] : memref<1x128xf32, #tpu.memory_space<vmem>>, vector<1x128xf32>
    %272 = vector.broadcast %271 : vector<1x128xf32> to vector<16x128xf32>
    %273 = arith.addf %270, %272 : vector<16x128xf32>
    %cst_51 = arith.constant 0.000000e+00 : f32
    %274 = vector.broadcast %cst_51 : f32 to vector<16x128xf32>
    %275 = arith.maximumf %273, %274 : vector<16x128xf32>
    %276 = vector.extract_strided_slice %275 {offsets = [0, 0], sizes = [12, 128], strides = [1, 1]} : vector<16x128xf32> to vector<12x128xf32>
    %277 = vector.extract_strided_slice %275 {offsets = [1, 0], sizes = [12, 128], strides = [1, 1]} : vector<16x128xf32> to vector<12x128xf32>
    %278 = arith.maximumf %276, %277 : vector<12x128xf32>
    %279 = vector.extract_strided_slice %275 {offsets = [2, 0], sizes = [12, 128], strides = [1, 1]} : vector<16x128xf32> to vector<12x128xf32>
    %280 = arith.maximumf %278, %279 : vector<12x128xf32>
    %281 = vector.extract_strided_slice %275 {offsets = [3, 0], sizes = [12, 128], strides = [1, 1]} : vector<16x128xf32> to vector<12x128xf32>
    %282 = arith.maximumf %280, %281 : vector<12x128xf32>
    %283 = vector.extract_strided_slice %275 {offsets = [4, 0], sizes = [12, 128], strides = [1, 1]} : vector<16x128xf32> to vector<12x128xf32>
    %284 = arith.maximumf %282, %283 : vector<12x128xf32>
    %285 = vector.extract_strided_slice %284 {offsets = [0, 0], sizes = [1, 128], strides = [1, 1]} : vector<12x128xf32> to vector<1x128xf32>
    %286 = vector.extract_strided_slice %284 {offsets = [3, 0], sizes = [1, 128], strides = [1, 1]} : vector<12x128xf32> to vector<1x128xf32>
    %287 = vector.extract_strided_slice %284 {offsets = [6, 0], sizes = [1, 128], strides = [1, 1]} : vector<12x128xf32> to vector<1x128xf32>
    %288 = vector.extract_strided_slice %284 {offsets = [9, 0], sizes = [1, 128], strides = [1, 1]} : vector<12x128xf32> to vector<1x128xf32>
    %289 = tpu.concatenate %285, %286, %287, %288 in 0 : vector<1x128xf32>, vector<1x128xf32>, vector<1x128xf32>, vector<1x128xf32> -> vector<4x128xf32>
    %cst_52 = arith.constant 0.000000e+00 : f32
    %290 = vector.broadcast %cst_52 : f32 to vector<1x128xf32>
    %291 = tpu.concatenate %290, %289, %290 in 0 : vector<1x128xf32>, vector<4x128xf32>, vector<1x128xf32> -> vector<6x128xf32>
    %292 = vector.extract_strided_slice %291 {offsets = [0, 0], sizes = [4, 128], strides = [1, 1]} : vector<6x128xf32> to vector<4x128xf32>
    %293 = vector.extract_strided_slice %291 {offsets = [1, 0], sizes = [4, 128], strides = [1, 1]} : vector<6x128xf32> to vector<4x128xf32>
    %294 = vector.extract_strided_slice %291 {offsets = [2, 0], sizes = [4, 128], strides = [1, 1]} : vector<6x128xf32> to vector<4x128xf32>
    %295 = tpu.concatenate %292, %293, %294 in 1 : vector<4x128xf32>, vector<4x128xf32>, vector<4x128xf32> -> vector<4x384xf32>
    %c0_53 = arith.constant 0 : index
    %c0_54 = arith.constant 0 : index
    %296 = vector.load %arg6[%c0_53, %c0_54] : memref<384x128xf32, #tpu.memory_space<vmem>>, vector<384x128xf32>
    %cst_55 = arith.constant dense<0.000000e+00> : vector<4x128xf32>
    %297 = tpu.matmul %295, %296, %cst_55 {dimension_numbers = #tpu.dot_dimension_numbers<[1], [0], [0], [1], [0, 0, 1, 1], [], []>} : vector<4x384xf32>, vector<384x128xf32>, vector<4x128xf32> -> vector<4x128xf32>
    %c0_56 = arith.constant 0 : index
    %c0_57 = arith.constant 0 : index
    %298 = vector.load %arg7[%c0_56, %c0_57] : memref<1x128xf32, #tpu.memory_space<vmem>>, vector<1x128xf32>
    %299 = vector.broadcast %298 : vector<1x128xf32> to vector<4x128xf32>
    %300 = arith.addf %297, %299 : vector<4x128xf32>
    %cst_58 = arith.constant 0.000000e+00 : f32
    %301 = vector.broadcast %cst_58 : f32 to vector<4x128xf32>
    %302 = arith.maximumf %300, %301 : vector<4x128xf32>
    %cst_59 = arith.constant 0xFF800000 : f32
    %303 = vector.broadcast %cst_59 : f32 to vector<1x128xf32>
    %304 = tpu.concatenate %303, %302, %303 in 0 : vector<1x128xf32>, vector<4x128xf32>, vector<1x128xf32> -> vector<6x128xf32>
    %305 = vector.extract_strided_slice %304 {offsets = [0, 0], sizes = [3, 128], strides = [1, 1]} : vector<6x128xf32> to vector<3x128xf32>
    %306 = vector.extract_strided_slice %304 {offsets = [1, 0], sizes = [3, 128], strides = [1, 1]} : vector<6x128xf32> to vector<3x128xf32>
    %307 = arith.maximumf %305, %306 : vector<3x128xf32>
    %308 = vector.extract_strided_slice %304 {offsets = [2, 0], sizes = [3, 128], strides = [1, 1]} : vector<6x128xf32> to vector<3x128xf32>
    %309 = arith.maximumf %307, %308 : vector<3x128xf32>
    %310 = vector.extract_strided_slice %304 {offsets = [3, 0], sizes = [3, 128], strides = [1, 1]} : vector<6x128xf32> to vector<3x128xf32>
    %311 = arith.maximumf %309, %310 : vector<3x128xf32>
    %312 = vector.extract_strided_slice %311 {offsets = [0, 0], sizes = [1, 128], strides = [1, 1]} : vector<3x128xf32> to vector<1x128xf32>
    %313 = vector.extract_strided_slice %311 {offsets = [2, 0], sizes = [1, 128], strides = [1, 1]} : vector<3x128xf32> to vector<1x128xf32>
    %314 = tpu.concatenate %312, %313 in 0 : vector<1x128xf32>, vector<1x128xf32> -> vector<2x128xf32>
    %cst_60 = arith.constant 0.000000e+00 : f32
    %315 = vector.broadcast %cst_60 : f32 to vector<1x128xf32>
    %316 = tpu.concatenate %315, %314, %315 in 0 : vector<1x128xf32>, vector<2x128xf32>, vector<1x128xf32> -> vector<4x128xf32>
    %317 = vector.extract_strided_slice %316 {offsets = [0, 0], sizes = [2, 128], strides = [1, 1]} : vector<4x128xf32> to vector<2x128xf32>
    %318 = vector.extract_strided_slice %316 {offsets = [1, 0], sizes = [2, 128], strides = [1, 1]} : vector<4x128xf32> to vector<2x128xf32>
    %319 = vector.extract_strided_slice %316 {offsets = [2, 0], sizes = [2, 128], strides = [1, 1]} : vector<4x128xf32> to vector<2x128xf32>
    %320 = tpu.concatenate %317, %318, %319 in 1 : vector<2x128xf32>, vector<2x128xf32>, vector<2x128xf32> -> vector<2x384xf32>
    %c0_61 = arith.constant 0 : index
    %c0_62 = arith.constant 0 : index
    %321 = vector.load %arg8[%c0_61, %c0_62] : memref<384x128xf32, #tpu.memory_space<vmem>>, vector<384x128xf32>
    %cst_63 = arith.constant dense<0.000000e+00> : vector<2x128xf32>
    %322 = tpu.matmul %320, %321, %cst_63 {dimension_numbers = #tpu.dot_dimension_numbers<[1], [0], [0], [1], [0, 0, 1, 1], [], []>} : vector<2x384xf32>, vector<384x128xf32>, vector<2x128xf32> -> vector<2x128xf32>
    %c0_64 = arith.constant 0 : index
    %c0_65 = arith.constant 0 : index
    %323 = vector.load %arg9[%c0_64, %c0_65] : memref<1x128xf32, #tpu.memory_space<vmem>>, vector<1x128xf32>
    %324 = vector.broadcast %323 : vector<1x128xf32> to vector<2x128xf32>
    %325 = arith.addf %322, %324 : vector<2x128xf32>
    %cst_66 = arith.constant 0.000000e+00 : f32
    %326 = vector.broadcast %cst_66 : f32 to vector<2x128xf32>
    %327 = arith.maximumf %325, %326 : vector<2x128xf32>
    %cst_67 = arith.constant 0xFF800000 : f32
    %328 = vector.broadcast %cst_67 : f32 to vector<1x128xf32>
    %329 = tpu.concatenate %328, %327, %328 in 0 : vector<1x128xf32>, vector<2x128xf32>, vector<1x128xf32> -> vector<4x128xf32>
    %330 = vector.extract_strided_slice %329 {offsets = [0, 0], sizes = [1, 128], strides = [1, 1]} : vector<4x128xf32> to vector<1x128xf32>
    %331 = vector.extract_strided_slice %329 {offsets = [1, 0], sizes = [1, 128], strides = [1, 1]} : vector<4x128xf32> to vector<1x128xf32>
    %332 = arith.maximumf %330, %331 : vector<1x128xf32>
    %333 = vector.extract_strided_slice %329 {offsets = [2, 0], sizes = [1, 128], strides = [1, 1]} : vector<4x128xf32> to vector<1x128xf32>
    %334 = arith.maximumf %332, %333 : vector<1x128xf32>
    %335 = vector.extract_strided_slice %329 {offsets = [3, 0], sizes = [1, 128], strides = [1, 1]} : vector<4x128xf32> to vector<1x128xf32>
    %336 = arith.maximumf %334, %335 : vector<1x128xf32>
    %c1_68 = arith.constant 1 : index
    %c0_69 = arith.constant 0 : index
    %c0_70 = arith.constant 0 : index
    %337 = vector.load %arg10[%c1_68, %c0_69, %c0_70] : memref<2x1x128xf32, #tpu.memory_space<vmem>>, vector<1x1x128xf32>
    %338 = vector.shape_cast %337 : vector<1x1x128xf32> to vector<1x128xf32>
    %339 = vector.shape_cast %336 : vector<1x128xf32> to vector<1x1x128xf32>
    tpu.vector_store %arg10[%c1_68, %c0_69, %c0_70], %339 {strides = array<i32>} : memref<2x1x128xf32, #tpu.memory_space<vmem>>, vector<1x1x128xf32>,
    return
  }
  func.func @transform_0(%arg0: i32) -> (i32, i32, i32) {
    %c0_i32 = arith.constant 0 : i32
    %c0_i32_0 = arith.constant 0 : i32
    %c0_i32_1 = arith.constant 0 : i32
    return %arg0, %c0_i32, %c0_i32_0 : i32, i32, i32
  }
  func.func @transform_1(%arg0: i32) -> (i32, i32) {
    %c0_i32 = arith.constant 0 : i32
    %c0_i32_0 = arith.constant 0 : i32
    %c0_i32_1 = arith.constant 0 : i32
    return %c0_i32, %c0_i32_0 : i32, i32
  }
  func.func @transform_2(%arg0: i32) -> (i32, i32) {
    %c0_i32 = arith.constant 0 : i32
    %c0_i32_0 = arith.constant 0 : i32
    %c0_i32_1 = arith.constant 0 : i32
    return %c0_i32, %c0_i32_0 : i32, i32
  }
  func.func @transform_3(%arg0: i32) -> (i32, i32) {
    %c0_i32 = arith.constant 0 : i32
    %c0_i32_0 = arith.constant 0 : i32
    %c0_i32_1 = arith.constant 0 : i32
    return %c0_i32, %c0_i32_0 : i32, i32
  }
  func.func @transform_4(%arg0: i32) -> (i32, i32) {
    %c0_i32 = arith.constant 0 : i32
    %c0_i32_0 = arith.constant 0 : i32
    %c0_i32_1 = arith.constant 0 : i32
    return %c0_i32, %c0_i32_0 : i32, i32
  }
  func.func @transform_5(%arg0: i32) -> (i32, i32) {
    %c0_i32 = arith.constant 0 : i32
    %c0_i32_0 = arith.constant 0 : i32
    %c0_i32_1 = arith.constant 0 : i32
    return %c0_i32, %c0_i32_0 : i32, i32
  }
  func.func @transform_6(%arg0: i32) -> (i32, i32) {
    %c0_i32 = arith.constant 0 : i32
    %c0_i32_0 = arith.constant 0 : i32
    %c0_i32_1 = arith.constant 0 : i32
    return %c0_i32, %c0_i32_0 : i32, i32
  }
  func.func @transform_7(%arg0: i32) -> (i32, i32) {
    %c0_i32 = arith.constant 0 : i32
    %c0_i32_0 = arith.constant 0 : i32
    %c0_i32_1 = arith.constant 0 : i32
    return %c0_i32, %c0_i32_0 : i32, i32
  }
  func.func @transform_8(%arg0: i32) -> (i32, i32) {
    %c0_i32 = arith.constant 0 : i32
    %c0_i32_0 = arith.constant 0 : i32
    %c0_i32_1 = arith.constant 0 : i32
    return %c0_i32, %c0_i32_0 : i32, i32
  }
  func.func @transform_9(%arg0: i32) -> (i32, i32, i32) {
    %c0_i32 = arith.constant 0 : i32
    %c0_i32_0 = arith.constant 0 : i32
    %c0_i32_1 = arith.constant 0 : i32
    return %arg0, %c0_i32, %c0_i32_0 : i32, i32, i32
  }
}

</mosaic_0001>

<llo_original>
// kernel: mhc_model_forward.1
$region0: #{mhc_model_forward.1}
  #allocation0 [shape = 'u32[]', space=smem, size = 0x4, offset = 0x4, fixed_abs, tag = 'smem constant byte address 0x4 - core index']
  #allocation1 [shape = 'u32[144,128]{1,0:T(1,128)}', space=vmem, size = 0x12000, scoped, tag = 'internal scratch']
  %s0 = inlined_call_operand.vmem [shape: f32[2,16,4], index: 0, kind: input, shape index: {}]
  %s1 = inlined_call_operand.vmem [shape: f32[12,128], index: 1, kind: input, shape index: {}]
  %s2 = inlined_call_operand.vmem [shape: f32[1,128], index: 2, kind: input, shape index: {}]
  %s3 = inlined_call_operand.hbm [shape: f32[384,128], index: 3, kind: input, shape index: {}]
  %s4 = inlined_call_operand.vmem [shape: f32[1,128], index: 4, kind: input, shape index: {}]
  %s5 = inlined_call_operand.hbm [shape: f32[384,128], index: 5, kind: input, shape index: {}]
  %s6 = inlined_call_operand.vmem [shape: f32[1,128], index: 6, kind: input, shape index: {}]
  %s7 = inlined_call_operand.hbm [shape: f32[384,128], index: 7, kind: input, shape index: {}]
  %s8 = inlined_call_operand.vmem [shape: f32[1,128], index: 8, kind: input, shape index: {}]
  %s9 = inlined_call_operand.hbm [shape: f32[2,1,128], index: 9, kind: output, shape index: {}]
  %s10 = sld [smem:[#allocation0]]
  $region58: #{mhc_model_forward.1} parent=0
    _
  %s12 = ssub.s32 1, %s10
  %s13 = scalar_select 0, %s12, %s10
  $region1: #{mhc_model_forward.1} parent=0
    #allocation2 [shape = 'u8[196608]{0}', space=vmem, size = 0x30000, scoped, tag = 'input window, operand 3, single buffered']
    #allocation3 [shape = 's32[1]{0}', space=sflag, size = 0x4, scoped, tag = 'scoped memory for mhc_model_forward.1']
    #allocation4 [shape = 's32[1]{0}', space=sflag, size = 0x4, scoped, tag = 'scoped memory for mhc_model_forward.1']
    #allocation5 [shape = 'u8[196608]{0}', space=vmem, size = 0x30000, scoped, tag = 'input window, operand 5, single buffered']
    #allocation6 [shape = 's32[1]{0}', space=sflag, size = 0x4, scoped, tag = 'scoped memory for mhc_model_forward.1']
    #allocation7 [shape = 'u8[196608]{0}', space=vmem, size = 0x30000, scoped, tag = 'input window, operand 7, single buffered']
    #allocation8 [shape = 'u8[1024]{0}', space=vmem, size = 0x400, scoped, tag = 'output window, operand 0, single buffered']
    %14 = vsyncpa [#allocation3], 0
    %15 = vsyncpa [#allocation6], 0
    %16 = vsyncpa [#allocation4], 0
    // Predicated region
    $region2: #{mhc_model_forward.1} parent=1 // pred_check
      _
    $region3: #{mhc_model_forward.1} parent=1 // pred_check_branch
      %18 = sbr.rel (0) target = $region5
    $region4: #{mhc_model_forward.1} parent=1 // pred_region
      _
    $region5: #{mhc_model_forward.1} parent=1 // pred_fallthru
      _
    // Predicated region
    $region6: #{mhc_model_forward.1} parent=1 // pred_check
      _
    $region7: #{mhc_model_forward.1} parent=1 // pred_check_branch
      %20 = sbr.rel (0) target = $region9
    $region8: #{mhc_model_forward.1} parent=1 // pred_region
      _
    $region9: #{mhc_model_forward.1} parent=1 // pred_fallthru
      _
    // Predicated region
    $region10: #{mhc_model_forward.1} parent=1 // pred_check
      _
    $region11: #{mhc_model_forward.1} parent=1 // pred_check_branch
      %22 = sbr.rel (0) target = $region13
    $region12: #{mhc_model_forward.1} parent=1 // pred_region
      _
    $region13: #{mhc_model_forward.1} parent=1 // pred_fallthru
      _
    // Predicated region
    $region14: #{mhc_model_forward.1} parent=1 // pred_check
      _
    $region15: #{mhc_model_forward.1} parent=1 // pred_check_branch
      %24 = sbr.rel (0) target = $region17
    $region16: #{mhc_model_forward.1} parent=1 // pred_region
      %s26 = ssub.s32 6144, 6144
      %27 = vsyncadd [#allocation3], %s26
      %s28 = sshll.u32 [#allocation2], 4
      %s29 = int_to_ptr.vmem [resolvable:$true] %s28
      %34 = dma.hbm_to_vmem [thread:$0]  %s3, 6144, %s29, [#allocation3], 128, 128, 8
    $region17: #{mhc_model_forward.1} parent=1 // pred_fallthru
      _
    // Predicated region
    $region18: #{mhc_model_forward.1} parent=1 // pred_check
      _
    $region19: #{mhc_model_forward.1} parent=1 // pred_check_branch
      %36 = sbr.rel (0) target = $region21
    $region20: #{mhc_model_forward.1} parent=1 // pred_region
      _
    $region21: #{mhc_model_forward.1} parent=1 // pred_fallthru
      _
    // Predicated region
    $region22: #{mhc_model_forward.1} parent=1 // pred_check
      _
    $region23: #{mhc_model_forward.1} parent=1 // pred_check_branch
      %38 = sbr.rel (0) target = $region25
    $region24: #{mhc_model_forward.1} parent=1 // pred_region
      %s40 = ssub.s32 6144, 6144
      %41 = vsyncadd [#allocation6], %s40
      %s42 = sshll.u32 [#allocation5], 4
      %s43 = int_to_ptr.vmem [resolvable:$true] %s42
      %48 = dma.hbm_to_vmem [thread:$0]  %s5, 6144, %s43, [#allocation6], 128, 128, 8
    $region25: #{mhc_model_forward.1} parent=1 // pred_fallthru
      _
    // Predicated region
    $region26: #{mhc_model_forward.1} parent=1 // pred_check
      _
    $region27: #{mhc_model_forward.1} parent=1 // pred_check_branch
      %50 = sbr.rel (0) target = $region29
    $region28: #{mhc_model_forward.1} parent=1 // pred_region
      _
    $region29: #{mhc_model_forward.1} parent=1 // pred_fallthru
      _
    // Predicated region
    $region30: #{mhc_model_forward.1} parent=1 // pred_check
      _
    $region31: #{mhc_model_forward.1} parent=1 // pred_check_branch
      %52 = sbr.rel (0) target = $region33
    $region32: #{mhc_model_forward.1} parent=1 // pred_region
      %s54 = ssub.s32 6144, 6144
      %55 = vsyncadd [#allocation6], %s54
      %s56 = sshll.u32 [#allocation7], 4
      %s57 = int_to_ptr.vmem [resolvable:$true] %s56
      %62 = dma.hbm_to_vmem [thread:$0]  %s7, 6144, %s57, [#allocation6], 128, 128, 8
    $region33: #{mhc_model_forward.1} parent=1 // pred_fallthru
      _
    // Predicated region
    $region34: #{mhc_model_forward.1} parent=1 // pred_check
      _
    $region35: #{mhc_model_forward.1} parent=1 // pred_check_branch
      %64 = sbr.rel (0) target = $region37
    $region36: #{mhc_model_forward.1} parent=1 // pred_region
      _
    $region37: #{mhc_model_forward.1} parent=1 // pred_fallthru
      _
    // Predicated region
    $region38: #{mhc_model_forward.1} parent=1 // pred_check
      _
    $region39: #{mhc_model_forward.1} parent=1 // pred_check_branch
      %66 = sbr.rel (0) target = $region41
    $region40: #{mhc_model_forward.1} parent=1 // pred_region
      %67 = dma.done [#allocation3], 6144
    $region41: #{mhc_model_forward.1} parent=1 // pred_fallthru
      _
    // Predicated region
    $region42: #{mhc_model_forward.1} parent=1 // pred_check
      _
    $region43: #{mhc_model_forward.1} parent=1 // pred_check_branch
      %69 = sbr.rel (0) target = $region45
    $region44: #{mhc_model_forward.1} parent=1 // pred_region
      %70 = dma.done [#allocation6], 6144
    $region45: #{mhc_model_forward.1} parent=1 // pred_fallthru
      _
    // Predicated region
    $region46: #{mhc_model_forward.1} parent=1 // pred_check
      _
    $region47: #{mhc_model_forward.1} parent=1 // pred_check_branch
      %72 = sbr.rel (0) target = $region49
    $region48: #{mhc_model_forward.1} parent=1 // pred_region
      %73 = dma.done [#allocation6], 6144
    $region49: #{mhc_model_forward.1} parent=1 // pred_fallthru
      _
    %v74 = vld [vmem:[%s0] sm:$0xff]
    %v75 = vld [vmem:[%s0 + $0x8] sm:$0xff]
    %vm78 = vcmask 1040384
    %v79 = vrot.slane %v74, 7
    %v80 = vrot.slane %v75, 7
    %v81 = vsel %vm78, %v79, %v80
    %v84 = vsel %vm78, 0.0, %v79
    %v85 = vsel %vm78, %v80, 0.0
    %v86 = vld [vmem:[%s1] sm:$0xff]
    %v87 = vld [vmem:[%s1 + $0x8] sm:$0xf]
    %89 = vset.pattern.permute.xlu0 0
    %90 = vperm.xlu0 %89, %v84
    %v91 = vpop.permute.xlu0 %90
    %93 = vset.pattern.permute.xlu0 0
    %94 = vperm.xlu0 %93, %v81
    %v95 = vpop.permute.xlu0 %94
    %v97 = vlaneseq
    %v98 = vshrl.u32 %v97, 7
    %v99 = vsub.s32 0, %v98
    %v100 = vrot.slane %v86, %v99
    %v101 = vmul.f32 %v91, %v100
    %v102 = vmul.f32 %v95, %v100
    %v103 = vadd.f32 %v101, 0.0
    %v104 = vadd.f32 %v102, 0.0
    %105 = vset.pattern.permute.xlu0 1
    %106 = vperm.xlu0 %105, %v84
    %v107 = vpop.permute.xlu0 %106
    %109 = vset.pattern.permute.xlu0 1
    %110 = vperm.xlu0 %109, %v81
    %v111 = vpop.permute.xlu0 %110
    %v113 = vlaneseq
    %v114 = vshrl.u32 %v113, 7
    %v115 = vsub.s32 1, %v114
    %v116 = vrot.slane %v86, %v115
    %v117 = vmul.f32 %v107, %v116
    %v118 = vmul.f32 %v111, %v116
    %v119 = vadd.f32 %v103, %v117
    %v120 = vadd.f32 %v104, %v118
    %121 = vset.pattern.permute.xlu0 2
    %122 = vperm.xlu0 %121, %v84
    %v123 = vpop.permute.xlu0 %122
    %125 = vset.pattern.permute.xlu0 2
    %126 = vperm.xlu0 %125, %v81
    %v127 = vpop.permute.xlu0 %126
    %v129 = vlaneseq
    %v130 = vshrl.u32 %v129, 7
    %v131 = vsub.s32 2, %v130
    %v132 = vrot.slane %v86, %v131
    %v133 = vmul.f32 %v123, %v132
    %v134 = vmul.f32 %v127, %v132
    %v135 = vadd.f32 %v119, %v133
    %v136 = vadd.f32 %v120, %v134
    %137 = vset.pattern.permute.xlu0 3
    %138 = vperm.xlu0 %137, %v84
    %v139 = vpop.permute.xlu0 %138
    %141 = vset.pattern.permute.xlu0 3
    %142 = vperm.xlu0 %141, %v81
    %v143 = vpop.permute.xlu0 %142
    %v145 = vlaneseq
    %v146 = vshrl.u32 %v145, 7
    %v147 = vsub.s32 3, %v146
    %v148 = vrot.slane %v86, %v147
    %v149 = vmul.f32 %v139, %v148
    %v150 = vmul.f32 %v143, %v148
    %v151 = vadd.f32 %v135, %v149
    %v152 = vadd.f32 %v136, %v150
    %154 = vset.pattern.permute.xlu0 0
    %155 = vperm.xlu0 %154, %v85
    %v156 = vpop.permute.xlu0 %155
    %v158 = vlaneseq
    %v159 = vshrl.u32 %v158, 7
    %v160 = vsub.s32 4, %v159
    %v161 = vrot.slane %v86, %v160
    %v162 = vmul.f32 %v91, %v161
    %v163 = vmul.f32 %v95, %v161
    %v164 = vmul.f32 %v156, %v161
    %vm168 = vcmask 1046528
    %v169 = vrot.slane %v162, 1
    %v170 = vrot.slane %v163, 1
    %v171 = vsel %vm168, %v169, %v170
    %v172 = vrot.slane %v164, 1
    %v173 = vsel %vm168, %v170, %v172
    %v176 = vadd.f32 %v151, %v171
    %v177 = vadd.f32 %v152, %v173
    %178 = vset.pattern.permute.xlu0 1
    %179 = vperm.xlu0 %178, %v85
    %v180 = vpop.permute.xlu0 %179
    %v182 = vlaneseq
    %v183 = vshrl.u32 %v182, 7
    %v184 = vsub.s32 5, %v183
    %v185 = vrot.slane %v86, %v184
    %v186 = vmul.f32 %v107, %v185
    %v187 = vmul.f32 %v111, %v185
    %v188 = vmul.f32 %v180, %v185
    %v192 = vrot.slane %v186, 1
    %v193 = vrot.slane %v187, 1
    %v194 = vsel %vm168, %v192, %v193
    %v195 = vrot.slane %v188, 1
    %v196 = vsel %vm168, %v193, %v195
    %v199 = vadd.f32 %v176, %v194
    %v200 = vadd.f32 %v177, %v196
    %201 = vset.pattern.permute.xlu0 2
    %202 = vperm.xlu0 %201, %v85
    %v203 = vpop.permute.xlu0 %202
    %v205 = vlaneseq
    %v206 = vshrl.u32 %v205, 7
    %v207 = vsub.s32 6, %v206
    %v208 = vrot.slane %v86, %v207
    %v209 = vmul.f32 %v123, %v208
    %v210 = vmul.f32 %v127, %v208
    %v211 = vmul.f32 %v203, %v208
    %v215 = vrot.slane %v209, 1
    %v216 = vrot.slane %v210, 1
    %v217 = vsel %vm168, %v215, %v216
    %v218 = vrot.slane %v211, 1
    %v219 = vsel %vm168, %v216, %v218
    %v222 = vadd.f32 %v199, %v217
    %v223 = vadd.f32 %v200, %v219
    %224 = vset.pattern.permute.xlu0 3
    %225 = vperm.xlu0 %224, %v85
    %v226 = vpop.permute.xlu0 %225
    %v228 = vlaneseq
    %v229 = vshrl.u32 %v228, 7
    %v230 = vsub.s32 7, %v229
    %v231 = vrot.slane %v86, %v230
    %v232 = vmul.f32 %v139, %v231
    %v233 = vmul.f32 %v143, %v231
    %v234 = vmul.f32 %v226, %v231
    %v238 = vrot.slane %v232, 1
    %v239 = vrot.slane %v233, 1
    %v240 = vsel %vm168, %v238, %v239
    %v241 = vrot.slane %v234, 1
    %v242 = vsel %vm168, %v239, %v241
    %v245 = vadd.f32 %v222, %v240
    %v246 = vadd.f32 %v223, %v242
    %v247 = vlaneseq
    %v248 = vshrl.u32 %v247, 7
    %v249 = vsub.s32 0, %v248
    %v250 = vrot.slane %v87, %v249
    %v251 = vmul.f32 %v91, %v250
    %v252 = vmul.f32 %v95, %v250
    %v253 = vmul.f32 %v156, %v250
    %vm257 = vcmask 1045504
    %v258 = vrot.slane %v251, 2
    %v259 = vrot.slane %v252, 2
    %v260 = vsel %vm257, %v258, %v259
    %v261 = vrot.slane %v253, 2
    %v262 = vsel %vm257, %v259, %v261
    %v265 = vadd.f32 %v245, %v260
    %v266 = vadd.f32 %v246, %v262
    %v267 = vlaneseq
    %v268 = vshrl.u32 %v267, 7
    %v269 = vsub.s32 1, %v268
    %v270 = vrot.slane %v87, %v269
    %v271 = vmul.f32 %v107, %v270
    %v272 = vmul.f32 %v111, %v270
    %v273 = vmul.f32 %v180, %v270
    %v277 = vrot.slane %v271, 2
    %v278 = vrot.slane %v272, 2
    %v279 = vsel %vm257, %v277, %v278
    %v280 = vrot.slane %v273, 2
    %v281 = vsel %vm257, %v278, %v280
    %v284 = vadd.f32 %v265, %v279
    %v285 = vadd.f32 %v266, %v281
    %v286 = vlaneseq
    %v287 = vshrl.u32 %v286, 7
    %v288 = vsub.s32 2, %v287
    %v289 = vrot.slane %v87, %v288
    %v290 = vmul.f32 %v123, %v289
    %v291 = vmul.f32 %v127, %v289
    %v292 = vmul.f32 %v203, %v289
    %v296 = vrot.slane %v290, 2
    %v297 = vrot.slane %v291, 2
    %v298 = vsel %vm257, %v296, %v297
    %v299 = vrot.slane %v292, 2
    %v300 = vsel %vm257, %v297, %v299
    %v303 = vadd.f32 %v284, %v298
    %v304 = vadd.f32 %v285, %v300
    %v305 = vlaneseq
    %v306 = vshrl.u32 %v305, 7
    %v307 = vsub.s32 3, %v306
    %v308 = vrot.slane %v87, %v307
    %v309 = vmul.f32 %v139, %v308
    %v310 = vmul.f32 %v143, %v308
    %v311 = vmul.f32 %v226, %v308
    %v315 = vrot.slane %v309, 2
    %v316 = vrot.slane %v310, 2
    %v317 = vsel %vm257, %v315, %v316
    %v318 = vrot.slane %v311, 2
    %v319 = vsel %vm257, %v316, %v318
    %v322 = vadd.f32 %v303, %v317
    %v323 = vadd.f32 %v304, %v319
    %v324 = vld [vmem:[%s2] sm:$0x1]
    %v326 = vlaneseq
    %v327 = vshrl.u32 %v326, 7
    %v328 = vsub.s32 0, %v327
    %v329 = vrot.slane %v324, %v328
    %v331 = vadd.f32 %v322, %v329
    %v332 = vadd.f32 %v323, %v329
    %v333 = vmax.f32 %v331, 0.0
    %v334 = vmax.f32 %v332, 0.0
    %v337 = vrot.slane %v333, 7
    %v338 = vrot.slane %v334, 7
    %v339 = vsel %vm78, %v337, %v338
    %v343 = vsel %vm78, -inf, %v337
    %v344 = vsel %vm78, %v338, -inf
    %v347 = vrot.slane %v343, 1
    %v348 = vrot.slane %v339, 1
    %v349 = vsel %vm168, %v347, %v348
    %v350 = vrot.slane %v344, 1
    %v351 = vsel %vm168, %v348, %v350
    %v354 = vmax.f32 %v343, %v349
    %v355 = vmax.f32 %v339, %v351
    %v356 = vrot.slane %v343, 2
    %v357 = vrot.slane %v339, 2
    %v358 = vsel %vm257, %v356, %v357
    %v359 = vrot.slane %v344, 2
    %v360 = vsel %vm257, %v357, %v359
    %v363 = vmax.f32 %v354, %v358
    %v364 = vmax.f32 %v355, %v360
    %v367 = vrot.slane %v363, 7
    %v368 = vrot.slane %v364, 7
    %v369 = vsel %vm78, %v367, %v368
    %v373 = vsel %vm78, 0.0, %v367
    %v374 = vsel %vm78, %v368, 0.0
    %v377 = vrot.slane %v373, 1
    %v378 = vrot.slane %v369, 1
    %v379 = vsel %vm168, %v377, %v378
    %v380 = vrot.slane %v374, 1
    %v381 = vsel %vm168, %v378, %v380
    %v384 = vrot.slane %v373, 2
    %v385 = vrot.slane %v369, 2
    %v386 = vsel %vm257, %v384, %v385
    %v387 = vrot.slane %v374, 2
    %v388 = vsel %vm257, %v385, %v387
    %v391 = vld [vmem:[#allocation2] sm:$0xff]
    %v392 = vld [vmem:[#allocation2 + $0x8] sm:$0xff]
    %v393 = vld [vmem:[#allocation2 + $0x10] sm:$0xff]
    %v394 = vld [vmem:[#allocation2 + $0x18] sm:$0xff]
    %v395 = vld [vmem:[#allocation2 + $0x20] sm:$0xff]
    %v396 = vld [vmem:[#allocation2 + $0x28] sm:$0xff]
    %v397 = vld [vmem:[#allocation2 + $0x30] sm:$0xff]
    %v398 = vld [vmem:[#allocation2 + $0x38] sm:$0xff]
    %v399 = vld [vmem:[#allocation2 + $0x40] sm:$0xff]
    %v400 = vld [vmem:[#allocation2 + $0x48] sm:$0xff]
    %v401 = vld [vmem:[#allocation2 + $0x50] sm:$0xff]
    %v402 = vld [vmem:[#allocation2 + $0x58] sm:$0xff]
    %v403 = vld [vmem:[#allocation2 + $0x60] sm:$0xff]
    %v404 = vld [vmem:[#allocation2 + $0x68] sm:$0xff]
    %v405 = vld [vmem:[#allocation2 + $0x70] sm:$0xff]
    %v406 = vld [vmem:[#allocation2 + $0x78] sm:$0xff]
    %v407 = vld [vmem:[#allocation2 + $0x80] sm:$0xff]
    %v408 = vld [vmem:[#allocation2 + $0x88] sm:$0xff]
    %v409 = vld [vmem:[#allocation2 + $0x90] sm:$0xff]
    %v410 = vld [vmem:[#allocation2 + $0x98] sm:$0xff]
    %v411 = vld [vmem:[#allocation2 + $0xa0] sm:$0xff]
    %v412 = vld [vmem:[#allocation2 + $0xa8] sm:$0xff]
    %v413 = vld [vmem:[#allocation2 + $0xb0] sm:$0xff]
    %v414 = vld [vmem:[#allocation2 + $0xb8] sm:$0xff]
    %v415 = vld [vmem:[#allocation2 + $0xc0] sm:$0xff]
    %v416 = vld [vmem:[#allocation2 + $0xc8] sm:$0xff]
    %v417 = vld [vmem:[#allocation2 + $0xd0] sm:$0xff]
    %v418 = vld [vmem:[#allocation2 + $0xd8] sm:$0xff]
    %v419 = vld [vmem:[#allocation2 + $0xe0] sm:$0xff]
    %v420 = vld [vmem:[#allocation2 + $0xe8] sm:$0xff]
    %v421 = vld [vmem:[#allocation2 + $0xf0] sm:$0xff]
    %v422 = vld [vmem:[#allocation2 + $0xf8] sm:$0xff]
    %v423 = vld [vmem:[#allocation2 + $0x100] sm:$0xff]
    %v424 = vld [vmem:[#allocation2 + $0x108] sm:$0xff]
    %v425 = vld [vmem:[#allocation2 + $0x110] sm:$0xff]
    %v426 = vld [vmem:[#allocation2 + $0x118] sm:$0xff]
    %v427 = vld [vmem:[#allocation2 + $0x120] sm:$0xff]
    %v428 = vld [vmem:[#allocation2 + $0x128] sm:$0xff]
    %v429 = vld [vmem:[#allocation2 + $0x130] sm:$0xff]
    %v430 = vld [vmem:[#allocation2 + $0x138] sm:$0xff]
    %v431 = vld [vmem:[#allocation2 + $0x140] sm:$0xff]
    %v432 = vld [vmem:[#allocation2 + $0x148] sm:$0xff]
    %v433 = vld [vmem:[#allocation2 + $0x150] sm:$0xff]
    %v434 = vld [vmem:[#allocation2 + $0x158] sm:$0xff]
    %v435 = vld [vmem:[#allocation2 + $0x160] sm:$0xff]
    %v436 = vld [vmem:[#allocation2 + $0x168] sm:$0xff]
    %v437 = vld [vmem:[#allocation2 + $0x170] sm:$0xff]
    %v438 = vld [vmem:[#allocation2 + $0x178] sm:$0xff]
    %v439 = vld [vmem:[%s4] sm:$0x1]
    %v441 = vlaneseq
    %v442 = vshrl.u32 %v441, 7
    %v443 = vsub.s32 0, %v442
    %v444 = vrot.slane %v439, %v443
    %446 = vmatprep.subr.mxu0 0.0
    %447 = vmatpush1.msra.mxu0 %v391
    %448 = vmatprep.subr.mxu0 0.0
    %449 = vmatpush1.msra.mxu0 %v392
    %450 = vmatprep.subr.mxu0 0.0
    %451 = vmatpush1.msra.mxu0 %v393
    %452 = vmatprep.subr.mxu0 0.0
    %453 = vmatpush1.msra.mxu0 %v394
    %454 = vmatprep.subr.mxu0 0.0
    %455 = vmatpush1.msra.mxu0 %v395
    %456 = vmatprep.subr.mxu0 0.0
    %457 = vmatpush1.msra.mxu0 %v396
    %458 = vmatprep.subr.mxu0 0.0
    %459 = vmatpush1.msra.mxu0 %v397
    %460 = vmatprep.subr.mxu0 0.0
    %461 = vmatpush1.msra.mxu0 %v398
    %462 = vmatprep.subr.mxu0 0.0
    %463 = vmatpush1.msra.mxu0 %v399
    %464 = vmatprep.subr.mxu0 0.0
    %465 = vmatpush1.msra.mxu0 %v400
    %466 = vmatprep.subr.mxu0 0.0
    %467 = vmatpush1.msra.mxu0 %v401
    %468 = vmatprep.subr.mxu0 0.0
    %469 = vmatpush1.msra.mxu0 %v402
    %470 = vmatprep.subr.mxu0 0.0
    %471 = vmatpush1.msra.mxu0 %v403
    %472 = vmatprep.subr.mxu0 0.0
    %473 = vmatpush1.msra.mxu0 %v404
    %474 = vmatprep.subr.mxu0 0.0
    %475 = vmatpush1.msra.mxu0 %v405
    %476 = vmatprep.subr.mxu0 0.0
    %477 = vmatpush1.msra.mxu0 %v406
    %478 = vmatprep.subr.mxu0 0.0
    %479 = vmatpush1.msra.mxu0 %v407
    %480 = vmatprep.subr.mxu0 0.0
    %481 = vmatpush1.msra.mxu0 %v408
    %482 = vmatprep.subr.mxu0 0.0
    %483 = vmatpush1.msra.mxu0 %v409
    %484 = vmatprep.subr.mxu0 0.0
    %485 = vmatpush1.msra.mxu0 %v410
    %486 = vmatprep.subr.mxu0 0.0
    %487 = vmatpush1.msra.mxu0 %v411
    %488 = vmatprep.subr.mxu0 0.0
    %489 = vmatpush1.msra.mxu0 %v412
    %490 = vmatprep.subr.mxu0 0.0
    %491 = vmatpush1.msra.mxu0 %v413
    %492 = vmatprep.subr.mxu0 0.0
    %493 = vmatpush1.msra.mxu0 %v414
    %494 = vmatprep.subr.mxu0 0.0
    %495 = vmatpush1.msra.mxu0 %v415
    %496 = vmatprep.subr.mxu0 0.0
    %497 = vmatpush1.msra.mxu0 %v416
    %498 = vmatprep.subr.mxu0 0.0
    %499 = vmatpush1.msra.mxu0 %v417
    %500 = vmatprep.subr.mxu0 0.0
    %501 = vmatpush1.msra.mxu0 %v418
    %502 = vmatprep.subr.mxu0 0.0
    %503 = vmatpush1.msra.mxu0 %v419
    %504 = vmatprep.subr.mxu0 0.0
    %505 = vmatpush1.msra.mxu0 %v420
    %506 = vmatprep.subr.mxu0 0.0
    %507 = vmatpush1.msra.mxu0 %v421
    %508 = vmatprep.subr.mxu0 0.0
    %509 = vmatpush1.msra.mxu0 %v422
    %510 = vmatprep.mubr.f32.mxu0 %v379
    %511 = vmatmul.mubr.f32.gmra.mrb[0].mxu0 %v373
    %v512 = vpop.f32.mrb[0].mxu0
    %v513 = vadd.f32 %v444, %v512
    %v514 = vpop.f32.mrb[0].mxu0
    %515 = vmatprep.mubr.f32.mxu0 %v381
    %516 = vmatmul.mubr.f32.gmra.mrb[0].mxu0 %v369
    %v517 = vpop.f32.mrb[0].mxu0
    %v518 = vadd.f32 %v444, %v517
    %v519 = vpop.f32.mrb[0].mxu0
    %520 = vdwg.mxu0
    %521 = vmatprep.subr.mxu0 0.0
    %522 = vmatpush1.msra.mxu0 %v423
    %523 = vmatprep.subr.mxu0 0.0
    %524 = vmatpush1.msra.mxu0 %v424
    %525 = vmatprep.subr.mxu0 0.0
    %526 = vmatpush1.msra.mxu0 %v425
    %527 = vmatprep.subr.mxu0 0.0
    %528 = vmatpush1.msra.mxu0 %v426
    %529 = vmatprep.subr.mxu0 0.0
    %530 = vmatpush1.msra.mxu0 %v427
    %531 = vmatprep.subr.mxu0 0.0
    %532 = vmatpush1.msra.mxu0 %v428
    %533 = vmatprep.subr.mxu0 0.0
    %534 = vmatpush1.msra.mxu0 %v429
    %535 = vmatprep.subr.mxu0 0.0
    %536 = vmatpush1.msra.mxu0 %v430
    %537 = vmatprep.subr.mxu0 0.0
    %538 = vmatpush1.msra.mxu0 %v431
    %539 = vmatprep.subr.mxu0 0.0
    %540 = vmatpush1.msra.mxu0 %v432
    %541 = vmatprep.subr.mxu0 0.0
    %542 = vmatpush1.msra.mxu0 %v433
    %543 = vmatprep.subr.mxu0 0.0
    %544 = vmatpush1.msra.mxu0 %v434
    %545 = vmatprep.subr.mxu0 0.0
    %546 = vmatpush1.msra.mxu0 %v435
    %547 = vmatprep.subr.mxu0 0.0
    %548 = vmatpush1.msra.mxu0 %v436
    %549 = vmatprep.subr.mxu0 0.0
    %550 = vmatpush1.msra.mxu0 %v437
    %551 = vmatprep.subr.mxu0 0.0
    %552 = vmatpush1.msra.mxu0 %v438
    %553 = vmatprep.subr.mxu0 0.0
    %554 = vmatpush1.msra.mxu0 0.0
    %555 = vmatprep.subr.mxu0 0.0
    %556 = vmatpush1.msra.mxu0 0.0
    %557 = vmatprep.subr.mxu0 0.0
    %558 = vmatpush1.msra.mxu0 0.0
    %559 = vmatprep.subr.mxu0 0.0
    %560 = vmatpush1.msra.mxu0 0.0
    %561 = vmatprep.subr.mxu0 0.0
    %562 = vmatpush1.msra.mxu0 0.0
    %563 = vmatprep.subr.mxu0 0.0
    %564 = vmatpush1.msra.mxu0 0.0
    %565 = vmatprep.subr.mxu0 0.0
    %566 = vmatpush1.msra.mxu0 0.0
    %567 = vmatprep.subr.mxu0 0.0
    %568 = vmatpush1.msra.mxu0 0.0
    %569 = vmatprep.subr.mxu0 0.0
    %570 = vmatpush1.msra.mxu0 0.0
    %571 = vmatprep.subr.mxu0 0.0
    %572 = vmatpush1.msra.mxu0 0.0
    %573 = vmatprep.subr.mxu0 0.0
    %574 = vmatpush1.msra.mxu0 0.0
    %575 = vmatprep.subr.mxu0 0.0
    %576 = vmatpush1.msra.mxu0 0.0
    %577 = vmatprep.subr.mxu0 0.0
    %578 = vmatpush1.msra.mxu0 0.0
    %579 = vmatprep.subr.mxu0 0.0
    %580 = vmatpush1.msra.mxu0 0.0
    %581 = vmatprep.subr.mxu0 0.0
    %582 = vmatpush1.msra.mxu0 0.0
    %583 = vmatprep.subr.mxu0 0.0
    %584 = vmatpush1.msra.mxu0 0.0
    %585 = vmatprep.mubr.f32.mxu0 0.0
    %586 = vmatmul.mubr.f32.gmra.mrb[0].mxu0 %v386
    %v587 = vpop.f32.mrb[0].mxu0
    %v588 = vadd.f32 %v513, %v587
    %v589 = vpop.f32.mrb[0].mxu0
    %590 = vmatprep.mubr.f32.mxu0 0.0
    %591 = vmatmul.mubr.f32.gmra.mrb[0].mxu0 %v388
    %v592 = vpop.f32.mrb[0].mxu0
    %v593 = vadd.f32 %v518, %v592
    %v594 = vpop.f32.mrb[0].mxu0
    %595 = vdwg.mxu0
    %v596 = vmax.f32 %v588, 0.0
    %v597 = vmax.f32 %v593, 0.0
    %v600 = vrot.slane %v596, 1
    %v601 = vrot.slane %v597, 1
    %v602 = vsel %vm168, %v600, %v601
    %v605 = vmax.f32 %v596, %v602
    %v606 = vmax.f32 %v597, %v601
    %v607 = vrot.slane %v596, 2
    %v608 = vrot.slane %v597, 2
    %v609 = vsel %vm257, %v607, %v608
    %v612 = vmax.f32 %v605, %v609
    %v613 = vmax.f32 %v606, %v608
    %vm614 = vcmask 1044480
    %v615 = vrot.slane %v596, 3
    %v616 = vrot.slane %v597, 3
    %v617 = vsel %vm614, %v615, %v616
    %v620 = vmax.f32 %v612, %v617
    %v621 = vmax.f32 %v613, %v616
    %vm622 = vcmask 1043456
    %v623 = vrot.slane %v596, 4
    %v624 = vrot.slane %v597, 4
    %v625 = vsel %vm622, %v623, %v624
    %v628 = vmax.f32 %v620, %v625
    %v629 = vmax.f32 %v621, %v624
    %v631 = vrot.slane %v628, 2
    %v633 = vrot.slane %v628, 4
    %v636 = vrot.slane %v629, 6
    %v638 = vsel %vm78, %v628, %v631
    %vm639 = vcmask 1041408
    %v640 = vsel %vm639, %v638, %v633
    %vm641 = vcmask 1042432
    %v642 = vsel %vm641, %v640, %v636
    %v644 = vrot.slane %v642, 7
    %v646 = vsel %vm78, 0.0, %v644
    %v647 = vsel %vm614, %v646, 0.0
    %v649 = vrot.slane %v647, 1
    %v651 = vrot.slane %v647, 2
    %v653 = vld [vmem:[#allocation5] sm:$0xff]
    %v654 = vld [vmem:[#allocation5 + $0x8] sm:$0xff]
    %v655 = vld [vmem:[#allocation5 + $0x10] sm:$0xff]
    %v656 = vld [vmem:[#allocation5 + $0x18] sm:$0xff]
    %v657 = vld [vmem:[#allocation5 + $0x20] sm:$0xff]
    %v658 = vld [vmem:[#allocation5 + $0x28] sm:$0xff]
    %v659 = vld [vmem:[#allocation5 + $0x30] sm:$0xff]
    %v660 = vld [vmem:[#allocation5 + $0x38] sm:$0xff]
    %v661 = vld [vmem:[#allocation5 + $0x40] sm:$0xff]
    %v662 = vld [vmem:[#allocation5 + $0x48] sm:$0xff]
    %v663 = vld [vmem:[#allocation5 + $0x50] sm:$0xff]
    %v664 = vld [vmem:[#allocation5 + $0x58] sm:$0xff]
    %v665 = vld [vmem:[#allocation5 + $0x60] sm:$0xff]
    %v666 = vld [vmem:[#allocation5 + $0x68] sm:$0xff]
    %v667 = vld [vmem:[#allocation5 + $0x70] sm:$0xff]
    %v668 = vld [vmem:[#allocation5 + $0x78] sm:$0xff]
    %v669 = vld [vmem:[#allocation5 + $0x80] sm:$0xff]
    %v670 = vld [vmem:[#allocation5 + $0x88] sm:$0xff]
    %v671 = vld [vmem:[#allocation5 + $0x90] sm:$0xff]
    %v672 = vld [vmem:[#allocation5 + $0x98] sm:$0xff]
    %v673 = vld [vmem:[#allocation5 + $0xa0] sm:$0xff]
    %v674 = vld [vmem:[#allocation5 + $0xa8] sm:$0xff]
    %v675 = vld [vmem:[#allocation5 + $0xb0] sm:$0xff]
    %v676 = vld [vmem:[#allocation5 + $0xb8] sm:$0xff]
    %v677 = vld [vmem:[#allocation5 + $0xc0] sm:$0xff]
    %v678 = vld [vmem:[#allocation5 + $0xc8] sm:$0xff]
    %v679 = vld [vmem:[#allocation5 + $0xd0] sm:$0xff]
    %v680 = vld [vmem:[#allocation5 + $0xd8] sm:$0xff]
    %v681 = vld [vmem:[#allocation5 + $0xe0] sm:$0xff]
    %v682 = vld [vmem:[#allocation5 + $0xe8] sm:$0xff]
    %v683 = vld [vmem:[#allocation5 + $0xf0] sm:$0xff]
    %v684 = vld [vmem:[#allocation5 + $0xf8] sm:$0xff]
    %v685 = vld [vmem:[#allocation5 + $0x100] sm:$0xff]
    %v686 = vld [vmem:[#allocation5 + $0x108] sm:$0xff]
    %v687 = vld [vmem:[#allocation5 + $0x110] sm:$0xff]
    %v688 = vld [vmem:[#allocation5 + $0x118] sm:$0xff]
    %v689 = vld [vmem:[#allocation5 + $0x120] sm:$0xff]
    %v690 = vld [vmem:[#allocation5 + $0x128] sm:$0xff]
    %v691 = vld [vmem:[#allocation5 + $0x130] sm:$0xff]
    %v692 = vld [vmem:[#allocation5 + $0x138] sm:$0xff]
    %v693 = vld [vmem:[#allocation5 + $0x140] sm:$0xff]
    %v694 = vld [vmem:[#allocation5 + $0x148] sm:$0xff]
    %v695 = vld [vmem:[#allocation5 + $0x150] sm:$0xff]
    %v696 = vld [vmem:[#allocation5 + $0x158] sm:$0xff]
    %v697 = vld [vmem:[#allocation5 + $0x160] sm:$0xff]
    %v698 = vld [vmem:[#allocation5 + $0x168] sm:$0xff]
    %v699 = vld [vmem:[#allocation5 + $0x170] sm:$0xff]
    %v700 = vld [vmem:[#allocation5 + $0x178] sm:$0xff]
    %v701 = vld [vmem:[%s6] sm:$0x1]
    %v703 = vlaneseq
    %v704 = vshrl.u32 %v703, 7
    %v705 = vsub.s32 0, %v704
    %v706 = vrot.slane %v701, %v705
    %708 = vmatprep.subr.mxu0 0.0
    %709 = vmatpush1.msra.mxu0 %v653
    %710 = vmatprep.subr.mxu0 0.0
    %711 = vmatpush1.msra.mxu0 %v654
    %712 = vmatprep.subr.mxu0 0.0
    %713 = vmatpush1.msra.mxu0 %v655
    %714 = vmatprep.subr.mxu0 0.0
    %715 = vmatpush1.msra.mxu0 %v656
    %716 = vmatprep.subr.mxu0 0.0
    %717 = vmatpush1.msra.mxu0 %v657
    %718 = vmatprep.subr.mxu0 0.0
    %719 = vmatpush1.msra.mxu0 %v658
    %720 = vmatprep.subr.mxu0 0.0
    %721 = vmatpush1.msra.mxu0 %v659
    %722 = vmatprep.subr.mxu0 0.0
    %723 = vmatpush1.msra.mxu0 %v660
    %724 = vmatprep.subr.mxu0 0.0
    %725 = vmatpush1.msra.mxu0 %v661
    %726 = vmatprep.subr.mxu0 0.0
    %727 = vmatpush1.msra.mxu0 %v662
    %728 = vmatprep.subr.mxu0 0.0
    %729 = vmatpush1.msra.mxu0 %v663
    %730 = vmatprep.subr.mxu0 0.0
    %731 = vmatpush1.msra.mxu0 %v664
    %732 = vmatprep.subr.mxu0 0.0
    %733 = vmatpush1.msra.mxu0 %v665
    %734 = vmatprep.subr.mxu0 0.0
    %735 = vmatpush1.msra.mxu0 %v666
    %736 = vmatprep.subr.mxu0 0.0
    %737 = vmatpush1.msra.mxu0 %v667
    %738 = vmatprep.subr.mxu0 0.0
    %739 = vmatpush1.msra.mxu0 %v668
    %740 = vmatprep.subr.mxu0 0.0
    %741 = vmatpush1.msra.mxu0 %v669
    %742 = vmatprep.subr.mxu0 0.0
    %743 = vmatpush1.msra.mxu0 %v670
    %744 = vmatprep.subr.mxu0 0.0
    %745 = vmatpush1.msra.mxu0 %v671
    %746 = vmatprep.subr.mxu0 0.0
    %747 = vmatpush1.msra.mxu0 %v672
    %748 = vmatprep.subr.mxu0 0.0
    %749 = vmatpush1.msra.mxu0 %v673
    %750 = vmatprep.subr.mxu0 0.0
    %751 = vmatpush1.msra.mxu0 %v674
    %752 = vmatprep.subr.mxu0 0.0
    %753 = vmatpush1.msra.mxu0 %v675
    %754 = vmatprep.subr.mxu0 0.0
    %755 = vmatpush1.msra.mxu0 %v676
    %756 = vmatprep.subr.mxu0 0.0
    %757 = vmatpush1.msra.mxu0 %v677
    %758 = vmatprep.subr.mxu0 0.0
    %759 = vmatpush1.msra.mxu0 %v678
    %760 = vmatprep.subr.mxu0 0.0
    %761 = vmatpush1.msra.mxu0 %v679
    %762 = vmatprep.subr.mxu0 0.0
    %763 = vmatpush1.msra.mxu0 %v680
    %764 = vmatprep.subr.mxu0 0.0
    %765 = vmatpush1.msra.mxu0 %v681
    %766 = vmatprep.subr.mxu0 0.0
    %767 = vmatpush1.msra.mxu0 %v682
    %768 = vmatprep.subr.mxu0 0.0
    %769 = vmatpush1.msra.mxu0 %v683
    %770 = vmatprep.subr.mxu0 0.0
    %771 = vmatpush1.msra.mxu0 %v684
    %772 = vmatprep.mubr.f32.mxu0 %v649
    %773 = vmatmul.mubr.f32.gmra.mrb[0].mxu0 %v647
    %v774 = vpop.f32.mrb[0].mxu0
    %v775 = vadd.f32 %v706, %v774
    %v776 = vpop.f32.mrb[0].mxu0
    %777 = vdwg.mxu0
    %778 = vmatprep.subr.mxu0 0.0
    %779 = vmatpush1.msra.mxu0 %v685
    %780 = vmatprep.subr.mxu0 0.0
    %781 = vmatpush1.msra.mxu0 %v686
    %782 = vmatprep.subr.mxu0 0.0
    %783 = vmatpush1.msra.mxu0 %v687
    %784 = vmatprep.subr.mxu0 0.0
    %785 = vmatpush1.msra.mxu0 %v688
    %786 = vmatprep.subr.mxu0 0.0
    %787 = vmatpush1.msra.mxu0 %v689
    %788 = vmatprep.subr.mxu0 0.0
    %789 = vmatpush1.msra.mxu0 %v690
    %790 = vmatprep.subr.mxu0 0.0
    %791 = vmatpush1.msra.mxu0 %v691
    %792 = vmatprep.subr.mxu0 0.0
    %793 = vmatpush1.msra.mxu0 %v692
    %794 = vmatprep.subr.mxu0 0.0
    %795 = vmatpush1.msra.mxu0 %v693
    %796 = vmatprep.subr.mxu0 0.0
    %797 = vmatpush1.msra.mxu0 %v694
    %798 = vmatprep.subr.mxu0 0.0
    %799 = vmatpush1.msra.mxu0 %v695
    %800 = vmatprep.subr.mxu0 0.0
    %801 = vmatpush1.msra.mxu0 %v696
    %802 = vmatprep.subr.mxu0 0.0
    %803 = vmatpush1.msra.mxu0 %v697
    %804 = vmatprep.subr.mxu0 0.0
    %805 = vmatpush1.msra.mxu0 %v698
    %806 = vmatprep.subr.mxu0 0.0
    %807 = vmatpush1.msra.mxu0 %v699
    %808 = vmatprep.subr.mxu0 0.0
    %809 = vmatpush1.msra.mxu0 %v700
    %810 = vmatprep.subr.mxu0 0.0
    %811 = vmatpush1.msra.mxu0 0.0
    %812 = vmatprep.subr.mxu0 0.0
    %813 = vmatpush1.msra.mxu0 0.0
    %814 = vmatprep.subr.mxu0 0.0
    %815 = vmatpush1.msra.mxu0 0.0
    %816 = vmatprep.subr.mxu0 0.0
    %817 = vmatpush1.msra.mxu0 0.0
    %818 = vmatprep.subr.mxu0 0.0
    %819 = vmatpush1.msra.mxu0 0.0
    %820 = vmatprep.subr.mxu0 0.0
    %821 = vmatpush1.msra.mxu0 0.0
    %822 = vmatprep.subr.mxu0 0.0
    %823 = vmatpush1.msra.mxu0 0.0
    %824 = vmatprep.subr.mxu0 0.0
    %825 = vmatpush1.msra.mxu0 0.0
    %826 = vmatprep.subr.mxu0 0.0
    %827 = vmatpush1.msra.mxu0 0.0
    %828 = vmatprep.subr.mxu0 0.0
    %829 = vmatpush1.msra.mxu0 0.0
    %830 = vmatprep.subr.mxu0 0.0
    %831 = vmatpush1.msra.mxu0 0.0
    %832 = vmatprep.subr.mxu0 0.0
    %833 = vmatpush1.msra.mxu0 0.0
    %834 = vmatprep.subr.mxu0 0.0
    %835 = vmatpush1.msra.mxu0 0.0
    %836 = vmatprep.subr.mxu0 0.0
    %837 = vmatpush1.msra.mxu0 0.0
    %838 = vmatprep.subr.mxu0 0.0
    %839 = vmatpush1.msra.mxu0 0.0
    %840 = vmatprep.subr.mxu0 0.0
    %841 = vmatpush1.msra.mxu0 0.0
    %842 = vmatprep.mubr.f32.mxu0 0.0
    %843 = vmatmul.mubr.f32.gmra.mrb[0].mxu0 %v651
    %v844 = vpop.f32.mrb[0].mxu0
    %v845 = vadd.f32 %v775, %v844
    %v846 = vpop.f32.mrb[0].mxu0
    %847 = vdwg.mxu0
    %v848 = vmax.f32 %v845, 0.0
    %v850 = vrot.slane %v848, 7
    %v852 = vsel %vm78, -inf, %v850
    %v853 = vsel %vm614, %v852, -inf
    %v855 = vrot.slane %v853, 1
    %v857 = vmax.f32 %v853, %v855
    %v858 = vrot.slane %v853, 2
    %v860 = vmax.f32 %v857, %v858
    %v861 = vrot.slane %v853, 3
    %v863 = vmax.f32 %v860, %v861
    %v865 = vrot.slane %v863, 1
    %v867 = vsel %vm78, %v863, %v865
    %v869 = vrot.slane %v867, 7
    %v871 = vsel %vm78, 0.0, %v869
    %v872 = vsel %vm641, %v871, 0.0
    %v874 = vrot.slane %v872, 1
    %v876 = vrot.slane %v872, 2
    %v878 = vld [vmem:[#allocation7] sm:$0xff]
    %v879 = vld [vmem:[#allocation7 + $0x8] sm:$0xff]
    %v880 = vld [vmem:[#allocation7 + $0x10] sm:$0xff]
    %v881 = vld [vmem:[#allocation7 + $0x18] sm:$0xff]
    %v882 = vld [vmem:[#allocation7 + $0x20] sm:$0xff]
    %v883 = vld [vmem:[#allocation7 + $0x28] sm:$0xff]
    %v884 = vld [vmem:[#allocation7 + $0x30] sm:$0xff]
    %v885 = vld [vmem:[#allocation7 + $0x38] sm:$0xff]
    %v886 = vld [vmem:[#allocation7 + $0x40] sm:$0xff]
    %v887 = vld [vmem:[#allocation7 + $0x48] sm:$0xff]
    %v888 = vld [vmem:[#allocation7 + $0x50] sm:$0xff]
    %v889 = vld [vmem:[#allocation7 + $0x58] sm:$0xff]
    %v890 = vld [vmem:[#allocation7 + $0x60] sm:$0xff]
    %v891 = vld [vmem:[#allocation7 + $0x68] sm:$0xff]
    %v892 = vld [vmem:[#allocation7 + $0x70] sm:$0xff]
    %v893 = vld [vmem:[#allocation7 + $0x78] sm:$0xff]
    %v894 = vld [vmem:[#allocation7 + $0x80] sm:$0xff]
    %v895 = vld [vmem:[#allocation7 + $0x88] sm:$0xff]
    %v896 = vld [vmem:[#allocation7 + $0x90] sm:$0xff]
    %v897 = vld [vmem:[#allocation7 + $0x98] sm:$0xff]
    %v898 = vld [vmem:[#allocation7 + $0xa0] sm:$0xff]
    %v899 = vld [vmem:[#allocation7 + $0xa8] sm:$0xff]
    %v900 = vld [vmem:[#allocation7 + $0xb0] sm:$0xff]
    %v901 = vld [vmem:[#allocation7 + $0xb8] sm:$0xff]
    %v902 = vld [vmem:[#allocation7 + $0xc0] sm:$0xff]
    %v903 = vld [vmem:[#allocation7 + $0xc8] sm:$0xff]
    %v904 = vld [vmem:[#allocation7 + $0xd0] sm:$0xff]
    %v905 = vld [vmem:[#allocation7 + $0xd8] sm:$0xff]
    %v906 = vld [vmem:[#allocation7 + $0xe0] sm:$0xff]
    %v907 = vld [vmem:[#allocation7 + $0xe8] sm:$0xff]
    %v908 = vld [vmem:[#allocation7 + $0xf0] sm:$0xff]
    %v909 = vld [vmem:[#allocation7 + $0xf8] sm:$0xff]
    %v910 = vld [vmem:[#allocation7 + $0x100] sm:$0xff]
    %v911 = vld [vmem:[#allocation7 + $0x108] sm:$0xff]
    %v912 = vld [vmem:[#allocation7 + $0x110] sm:$0xff]
    %v913 = vld [vmem:[#allocation7 + $0x118] sm:$0xff]
    %v914 = vld [vmem:[#allocation7 + $0x120] sm:$0xff]
    %v915 = vld [vmem:[#allocation7 + $0x128] sm:$0xff]
    %v916 = vld [vmem:[#allocation7 + $0x130] sm:$0xff]
    %v917 = vld [vmem:[#allocation7 + $0x138] sm:$0xff]
    %v918 = vld [vmem:[#allocation7 + $0x140] sm:$0xff]
    %v919 = vld [vmem:[#allocation7 + $0x148] sm:$0xff]
    %v920 = vld [vmem:[#allocation7 + $0x150] sm:$0xff]
    %v921 = vld [vmem:[#allocation7 + $0x158] sm:$0xff]
    %v922 = vld [vmem:[#allocation7 + $0x160] sm:$0xff]
    %v923 = vld [vmem:[#allocation7 + $0x168] sm:$0xff]
    %v924 = vld [vmem:[#allocation7 + $0x170] sm:$0xff]
    %v925 = vld [vmem:[#allocation7 + $0x178] sm:$0xff]
    %v926 = vld [vmem:[%s8] sm:$0x1]
    %v928 = vlaneseq
    %v929 = vshrl.u32 %v928, 7
    %v930 = vsub.s32 0, %v929
    %v931 = vrot.slane %v926, %v930
    %933 = vmatprep.subr.mxu0 0.0
    %934 = vmatpush1.msra.mxu0 %v878
    %935 = vmatprep.subr.mxu0 0.0
    %936 = vmatpush1.msra.mxu0 %v879
    %937 = vmatprep.subr.mxu0 0.0
    %938 = vmatpush1.msra.mxu0 %v880
    %939 = vmatprep.subr.mxu0 0.0
    %940 = vmatpush1.msra.mxu0 %v881
    %941 = vmatprep.subr.mxu0 0.0
    %942 = vmatpush1.msra.mxu0 %v882
    %943 = vmatprep.subr.mxu0 0.0
    %944 = vmatpush1.msra.mxu0 %v883
    %945 = vmatprep.subr.mxu0 0.0
    %946 = vmatpush1.msra.mxu0 %v884
    %947 = vmatprep.subr.mxu0 0.0
    %948 = vmatpush1.msra.mxu0 %v885
    %949 = vmatprep.subr.mxu0 0.0
    %950 = vmatpush1.msra.mxu0 %v886
    %951 = vmatprep.subr.mxu0 0.0
    %952 = vmatpush1.msra.mxu0 %v887
    %953 = vmatprep.subr.mxu0 0.0
    %954 = vmatpush1.msra.mxu0 %v888
    %955 = vmatprep.subr.mxu0 0.0
    %956 = vmatpush1.msra.mxu0 %v889
    %957 = vmatprep.subr.mxu0 0.0
    %958 = vmatpush1.msra.mxu0 %v890
    %959 = vmatprep.subr.mxu0 0.0
    %960 = vmatpush1.msra.mxu0 %v891
    %961 = vmatprep.subr.mxu0 0.0
    %962 = vmatpush1.msra.mxu0 %v892
    %963 = vmatprep.subr.mxu0 0.0
    %964 = vmatpush1.msra.mxu0 %v893
    %965 = vmatprep.subr.mxu0 0.0
    %966 = vmatpush1.msra.mxu0 %v894
    %967 = vmatprep.subr.mxu0 0.0
    %968 = vmatpush1.msra.mxu0 %v895
    %969 = vmatprep.subr.mxu0 0.0
    %970 = vmatpush1.msra.mxu0 %v896
    %971 = vmatprep.subr.mxu0 0.0
    %972 = vmatpush1.msra.mxu0 %v897
    %973 = vmatprep.subr.mxu0 0.0
    %974 = vmatpush1.msra.mxu0 %v898
    %975 = vmatprep.subr.mxu0 0.0
    %976 = vmatpush1.msra.mxu0 %v899
    %977 = vmatprep.subr.mxu0 0.0
    %978 = vmatpush1.msra.mxu0 %v900
    %979 = vmatprep.subr.mxu0 0.0
    %980 = vmatpush1.msra.mxu0 %v901
    %981 = vmatprep.subr.mxu0 0.0
    %982 = vmatpush1.msra.mxu0 %v902
    %983 = vmatprep.subr.mxu0 0.0
    %984 = vmatpush1.msra.mxu0 %v903
    %985 = vmatprep.subr.mxu0 0.0
    %986 = vmatpush1.msra.mxu0 %v904
    %987 = vmatprep.subr.mxu0 0.0
    %988 = vmatpush1.msra.mxu0 %v905
    %989 = vmatprep.subr.mxu0 0.0
    %990 = vmatpush1.msra.mxu0 %v906
    %991 = vmatprep.subr.mxu0 0.0
    %992 = vmatpush1.msra.mxu0 %v907
    %993 = vmatprep.subr.mxu0 0.0
    %994 = vmatpush1.msra.mxu0 %v908
    %995 = vmatprep.subr.mxu0 0.0
    %996 = vmatpush1.msra.mxu0 %v909
    %997 = vmatprep.mubr.f32.mxu0 %v874
    %998 = vmatmul.mubr.f32.gmra.mrb[0].mxu0 %v872
    %v999 = vpop.f32.mrb[0].mxu0
    %v1000 = vadd.f32 %v931, %v999
    %v1001 = vpop.f32.mrb[0].mxu0
    %1002 = vdwg.mxu0
    %1003 = vmatprep.subr.mxu0 0.0
    %1004 = vmatpush1.msra.mxu0 %v910
    %1005 = vmatprep.subr.mxu0 0.0
    %1006 = vmatpush1.msra.mxu0 %v911
    %1007 = vmatprep.subr.mxu0 0.0
    %1008 = vmatpush1.msra.mxu0 %v912
    %1009 = vmatprep.subr.mxu0 0.0
    %1010 = vmatpush1.msra.mxu0 %v913
    %1011 = vmatprep.subr.mxu0 0.0
    %1012 = vmatpush1.msra.mxu0 %v914
    %1013 = vmatprep.subr.mxu0 0.0
    %1014 = vmatpush1.msra.mxu0 %v915
    %1015 = vmatprep.subr.mxu0 0.0
    %1016 = vmatpush1.msra.mxu0 %v916
    %1017 = vmatprep.subr.mxu0 0.0
    %1018 = vmatpush1.msra.mxu0 %v917
    %1019 = vmatprep.subr.mxu0 0.0
    %1020 = vmatpush1.msra.mxu0 %v918
    %1021 = vmatprep.subr.mxu0 0.0
    %1022 = vmatpush1.msra.mxu0 %v919
    %1023 = vmatprep.subr.mxu0 0.0
    %1024 = vmatpush1.msra.mxu0 %v920
    %1025 = vmatprep.subr.mxu0 0.0
    %1026 = vmatpush1.msra.mxu0 %v921
    %1027 = vmatprep.subr.mxu0 0.0
    %1028 = vmatpush1.msra.mxu0 %v922
    %1029 = vmatprep.subr.mxu0 0.0
    %1030 = vmatpush1.msra.mxu0 %v923
    %1031 = vmatprep.subr.mxu0 0.0
    %1032 = vmatpush1.msra.mxu0 %v924
    %1033 = vmatprep.subr.mxu0 0.0
    %1034 = vmatpush1.msra.mxu0 %v925
    %1035 = vmatprep.subr.mxu0 0.0
    %1036 = vmatpush1.msra.mxu0 0.0
    %1037 = vmatprep.subr.mxu0 0.0
    %1038 = vmatpush1.msra.mxu0 0.0
    %1039 = vmatprep.subr.mxu0 0.0
    %1040 = vmatpush1.msra.mxu0 0.0
    %1041 = vmatprep.subr.mxu0 0.0
    %1042 = vmatpush1.msra.mxu0 0.0
    %1043 = vmatprep.subr.mxu0 0.0
    %1044 = vmatpush1.msra.mxu0 0.0
    %1045 = vmatprep.subr.mxu0 0.0
    %1046 = vmatpush1.msra.mxu0 0.0
    %1047 = vmatprep.subr.mxu0 0.0
    %1048 = vmatpush1.msra.mxu0 0.0
    %1049 = vmatprep.subr.mxu0 0.0
    %1050 = vmatpush1.msra.mxu0 0.0
    %1051 = vmatprep.subr.mxu0 0.0
    %1052 = vmatpush1.msra.mxu0 0.0
    %1053 = vmatprep.subr.mxu0 0.0
    %1054 = vmatpush1.msra.mxu0 0.0
    %1055 = vmatprep.subr.mxu0 0.0
    %1056 = vmatpush1.msra.mxu0 0.0
    %1057 = vmatprep.subr.mxu0 0.0
    %1058 = vmatpush1.msra.mxu0 0.0
    %1059 = vmatprep.subr.mxu0 0.0
    %1060 = vmatpush1.msra.mxu0 0.0
    %1061 = vmatprep.subr.mxu0 0.0
    %1062 = vmatpush1.msra.mxu0 0.0
    %1063 = vmatprep.subr.mxu0 0.0
    %1064 = vmatpush1.msra.mxu0 0.0
    %1065 = vmatprep.subr.mxu0 0.0
    %1066 = vmatpush1.msra.mxu0 0.0
    %1067 = vmatprep.mubr.f32.mxu0 0.0
    %1068 = vmatmul.mubr.f32.gmra.mrb[0].mxu0 %v876
    %v1069 = vpop.f32.mrb[0].mxu0
    %v1070 = vadd.f32 %v1000, %v1069
    %v1071 = vpop.f32.mrb[0].mxu0
    %1072 = vdwg.mxu0
    %v1073 = vmax.f32 %v1070, 0.0
    %v1075 = vrot.slane %v1073, 7
    %v1077 = vsel %vm78, -inf, %v1075
    %v1078 = vsel %vm641, %v1077, -inf
    %v1080 = vrot.slane %v1078, 1
    %v1082 = vmax.f32 %v1078, %v1080
    %v1083 = vrot.slane %v1078, 2
    %v1085 = vmax.f32 %v1082, %v1083
    %v1086 = vrot.slane %v1078, 3
    %v1088 = vmax.f32 %v1085, %v1086
    %1089 = vst [vmem:[#allocation8] sm:$0x1] %v1088
    %s1090 = scalar_lea.vmem %s0, 16
    %v1091 = vld [vmem:[%s1090] sm:$0xff]
    %v1092 = vld [vmem:[%s1090 + $0x8] sm:$0xff]
    %v1095 = vrot.slane %v1091, 7
    %v1096 = vrot.slane %v1092, 7
    %v1097 = vsel %vm78, %v1095, %v1096
    %v1100 = vsel %vm78, 0.0, %v1095
    %v1101 = vsel %vm78, %v1096, 0.0
    %v1102 = vld [vmem:[%s1] sm:$0xff]
    %v1103 = vld [vmem:[%s1 + $0x8] sm:$0xf]
    %1105 = vset.pattern.permute.xlu0 0
    %1106 = vperm.xlu0 %1105, %v1100
    %v1107 = vpop.permute.xlu0 %1106
    %1109 = vset.pattern.permute.xlu0 0
    %1110 = vperm.xlu0 %1109, %v1097
    %v1111 = vpop.permute.xlu0 %1110
    %v1113 = vlaneseq
    %v1114 = vshrl.u32 %v1113, 7
    %v1115 = vsub.s32 0, %v1114
    %v1116 = vrot.slane %v1102, %v1115
    %v1117 = vmul.f32 %v1107, %v1116
    %v1118 = vmul.f32 %v1111, %v1116
    %v1119 = vadd.f32 %v1117, 0.0
    %v1120 = vadd.f32 %v1118, 0.0
    %1121 = vset.pattern.permute.xlu0 1
    %1122 = vperm.xlu0 %1121, %v1100
    %v1123 = vpop.permute.xlu0 %1122
    %1125 = vset.pattern.permute.xlu0 1
    %1126 = vperm.xlu0 %1125, %v1097
    %v1127 = vpop.permute.xlu0 %1126
    %v1129 = vlaneseq
    %v1130 = vshrl.u32 %v1129, 7
    %v1131 = vsub.s32 1, %v1130
    %v1132 = vrot.slane %v1102, %v1131
    %v1133 = vmul.f32 %v1123, %v1132
    %v1134 = vmul.f32 %v1127, %v1132
    %v1135 = vadd.f32 %v1119, %v1133
    %v1136 = vadd.f32 %v1120, %v1134
    %1137 = vset.pattern.permute.xlu0 2
    %1138 = vperm.xlu0 %1137, %v1100
    %v1139 = vpop.permute.xlu0 %1138
    %1141 = vset.pattern.permute.xlu0 2
    %1142 = vperm.xlu0 %1141, %v1097
    %v1143 = vpop.permute.xlu0 %1142
    %v1145 = vlaneseq
    %v1146 = vshrl.u32 %v1145, 7
    %v1147 = vsub.s32 2, %v1146
    %v1148 = vrot.slane %v1102, %v1147
    %v1149 = vmul.f32 %v1139, %v1148
    %v1150 = vmul.f32 %v1143, %v1148
    %v1151 = vadd.f32 %v1135, %v1149
    %v1152 = vadd.f32 %v1136, %v1150
    %1153 = vset.pattern.permute.xlu0 3
    %1154 = vperm.xlu0 %1153, %v1100
    %v1155 = vpop.permute.xlu0 %1154
    %1157 = vset.pattern.permute.xlu0 3
    %1158 = vperm.xlu0 %1157, %v1097
    %v1159 = vpop.permute.xlu0 %1158
    %v1161 = vlaneseq
    %v1162 = vshrl.u32 %v1161, 7
    %v1163 = vsub.s32 3, %v1162
    %v1164 = vrot.slane %v1102, %v1163
    %v1165 = vmul.f32 %v1155, %v1164
    %v1166 = vmul.f32 %v1159, %v1164
    %v1167 = vadd.f32 %v1151, %v1165
    %v1168 = vadd.f32 %v1152, %v1166
    %1170 = vset.pattern.permute.xlu0 0
    %1171 = vperm.xlu0 %1170, %v1101
    %v1172 = vpop.permute.xlu0 %1171
    %v1174 = vlaneseq
    %v1175 = vshrl.u32 %v1174, 7
    %v1176 = vsub.s32 4, %v1175
    %v1177 = vrot.slane %v1102, %v1176
    %v1178 = vmul.f32 %v1107, %v1177
    %v1179 = vmul.f32 %v1111, %v1177
    %v1180 = vmul.f32 %v1172, %v1177
    %v1184 = vrot.slane %v1178, 1
    %v1185 = vrot.slane %v1179, 1
    %v1186 = vsel %vm168, %v1184, %v1185
    %v1187 = vrot.slane %v1180, 1
    %v1188 = vsel %vm168, %v1185, %v1187
    %v1191 = vadd.f32 %v1167, %v1186
    %v1192 = vadd.f32 %v1168, %v1188
    %1193 = vset.pattern.permute.xlu0 1
    %1194 = vperm.xlu0 %1193, %v1101
    %v1195 = vpop.permute.xlu0 %1194
    %v1197 = vlaneseq
    %v1198 = vshrl.u32 %v1197, 7
    %v1199 = vsub.s32 5, %v1198
    %v1200 = vrot.slane %v1102, %v1199
    %v1201 = vmul.f32 %v1123, %v1200
    %v1202 = vmul.f32 %v1127, %v1200
    %v1203 = vmul.f32 %v1195, %v1200
    %v1207 = vrot.slane %v1201, 1
    %v1208 = vrot.slane %v1202, 1
    %v1209 = vsel %vm168, %v1207, %v1208
    %v1210 = vrot.slane %v1203, 1
    %v1211 = vsel %vm168, %v1208, %v1210
    %v1214 = vadd.f32 %v1191, %v1209
    %v1215 = vadd.f32 %v1192, %v1211
    %1216 = vset.pattern.permute.xlu0 2
    %1217 = vperm.xlu0 %1216, %v1101
    %v1218 = vpop.permute.xlu0 %1217
    %v1220 = vlaneseq
    %v1221 = vshrl.u32 %v1220, 7
    %v1222 = vsub.s32 6, %v1221
    %v1223 = vrot.slane %v1102, %v1222
    %v1224 = vmul.f32 %v1139, %v1223
    %v1225 = vmul.f32 %v1143, %v1223
    %v1226 = vmul.f32 %v1218, %v1223
    %v1230 = vrot.slane %v1224, 1
    %v1231 = vrot.slane %v1225, 1
    %v1232 = vsel %vm168, %v1230, %v1231
    %v1233 = vrot.slane %v1226, 1
    %v1234 = vsel %vm168, %v1231, %v1233
    %v1237 = vadd.f32 %v1214, %v1232
    %v1238 = vadd.f32 %v1215, %v1234
    %1239 = vset.pattern.permute.xlu0 3
    %1240 = vperm.xlu0 %1239, %v1101
    %v1241 = vpop.permute.xlu0 %1240
    %v1243 = vlaneseq
    %v1244 = vshrl.u32 %v1243, 7
    %v1245 = vsub.s32 7, %v1244
    %v1246 = vrot.slane %v1102, %v1245
    %v1247 = vmul.f32 %v1155, %v1246
    %v1248 = vmul.f32 %v1159, %v1246
    %v1249 = vmul.f32 %v1241, %v1246
    %v1253 = vrot.slane %v1247, 1
    %v1254 = vrot.slane %v1248, 1
    %v1255 = vsel %vm168, %v1253, %v1254
    %v1256 = vrot.slane %v1249, 1
    %v1257 = vsel %vm168, %v1254, %v1256
    %v1260 = vadd.f32 %v1237, %v1255
    %v1261 = vadd.f32 %v1238, %v1257
    %v1262 = vlaneseq
    %v1263 = vshrl.u32 %v1262, 7
    %v1264 = vsub.s32 0, %v1263
    %v1265 = vrot.slane %v1103, %v1264
    %v1266 = vmul.f32 %v1107, %v1265
    %v1267 = vmul.f32 %v1111, %v1265
    %v1268 = vmul.f32 %v1172, %v1265
    %v1272 = vrot.slane %v1266, 2
    %v1273 = vrot.slane %v1267, 2
    %v1274 = vsel %vm257, %v1272, %v1273
    %v1275 = vrot.slane %v1268, 2
    %v1276 = vsel %vm257, %v1273, %v1275
    %v1279 = vadd.f32 %v1260, %v1274
    %v1280 = vadd.f32 %v1261, %v1276
    %v1281 = vlaneseq
    %v1282 = vshrl.u32 %v1281, 7
    %v1283 = vsub.s32 1, %v1282
    %v1284 = vrot.slane %v1103, %v1283
    %v1285 = vmul.f32 %v1123, %v1284
    %v1286 = vmul.f32 %v1127, %v1284
    %v1287 = vmul.f32 %v1195, %v1284
    %v1291 = vrot.slane %v1285, 2
    %v1292 = vrot.slane %v1286, 2
    %v1293 = vsel %vm257, %v1291, %v1292
    %v1294 = vrot.slane %v1287, 2
    %v1295 = vsel %vm257, %v1292, %v1294
    %v1298 = vadd.f32 %v1279, %v1293
    %v1299 = vadd.f32 %v1280, %v1295
    %v1300 = vlaneseq
    %v1301 = vshrl.u32 %v1300, 7
    %v1302 = vsub.s32 2, %v1301
    %v1303 = vrot.slane %v1103, %v1302
    %v1304 = vmul.f32 %v1139, %v1303
    %v1305 = vmul.f32 %v1143, %v1303
    %v1306 = vmul.f32 %v1218, %v1303
    %v1310 = vrot.slane %v1304, 2
    %v1311 = vrot.slane %v1305, 2
    %v1312 = vsel %vm257, %v1310, %v1311
    %v1313 = vrot.slane %v1306, 2
    %v1314 = vsel %vm257, %v1311, %v1313
    %v1317 = vadd.f32 %v1298, %v1312
    %v1318 = vadd.f32 %v1299, %v1314
    %v1319 = vlaneseq
    %v1320 = vshrl.u32 %v1319, 7
    %v1321 = vsub.s32 3, %v1320
    %v1322 = vrot.slane %v1103, %v1321
    %v1323 = vmul.f32 %v1155, %v1322
    %v1324 = vmul.f32 %v1159, %v1322
    %v1325 = vmul.f32 %v1241, %v1322
    %v1329 = vrot.slane %v1323, 2
    %v1330 = vrot.slane %v1324, 2
    %v1331 = vsel %vm257, %v1329, %v1330
    %v1332 = vrot.slane %v1325, 2
    %v1333 = vsel %vm257, %v1330, %v1332
    %v1336 = vadd.f32 %v1317, %v1331
    %v1337 = vadd.f32 %v1318, %v1333
    %v1338 = vld [vmem:[%s2] sm:$0x1]
    %v1340 = vlaneseq
    %v1341 = vshrl.u32 %v1340, 7
    %v1342 = vsub.s32 0, %v1341
    %v1343 = vrot.slane %v1338, %v1342
    %v1345 = vadd.f32 %v1336, %v1343
    %v1346 = vadd.f32 %v1337, %v1343
    %v1347 = vmax.f32 %v1345, 0.0
    %v1348 = vmax.f32 %v1346, 0.0
    %v1351 = vrot.slane %v1347, 7
    %v1352 = vrot.slane %v1348, 7
    %v1353 = vsel %vm78, %v1351, %v1352
    %v1357 = vsel %vm78, -inf, %v1351
    %v1358 = vsel %vm78, %v1352, -inf
    %v1361 = vrot.slane %v1357, 1
    %v1362 = vrot.slane %v1353, 1
    %v1363 = vsel %vm168, %v1361, %v1362
    %v1364 = vrot.slane %v1358, 1
    %v1365 = vsel %vm168, %v1362, %v1364
    %v1368 = vmax.f32 %v1357, %v1363
    %v1369 = vmax.f32 %v1353, %v1365
    %v1370 = vrot.slane %v1357, 2
    %v1371 = vrot.slane %v1353, 2
    %v1372 = vsel %vm257, %v1370, %v1371
    %v1373 = vrot.slane %v1358, 2
    %v1374 = vsel %vm257, %v1371, %v1373
    %v1377 = vmax.f32 %v1368, %v1372
    %v1378 = vmax.f32 %v1369, %v1374
    %v1381 = vrot.slane %v1377, 7
    %v1382 = vrot.slane %v1378, 7
    %v1383 = vsel %vm78, %v1381, %v1382
    %v1387 = vsel %vm78, 0.0, %v1381
    %v1388 = vsel %vm78, %v1382, 0.0
    %v1391 = vrot.slane %v1387, 1
    %v1392 = vrot.slane %v1383, 1
    %v1393 = vsel %vm168, %v1391, %v1392
    %v1394 = vrot.slane %v1388, 1
    %v1395 = vsel %vm168, %v1392, %v1394
    %v1398 = vrot.slane %v1387, 2
    %v1399 = vrot.slane %v1383, 2
    %v1400 = vsel %vm257, %v1398, %v1399
    %v1401 = vrot.slane %v1388, 2
    %v1402 = vsel %vm257, %v1399, %v1401
    %v1405 = vld [vmem:[#allocation2] sm:$0xff]
    %v1406 = vld [vmem:[#allocation2 + $0x8] sm:$0xff]
    %v1407 = vld [vmem:[#allocation2 + $0x10] sm:$0xff]
    %v1408 = vld [vmem:[#allocation2 + $0x18] sm:$0xff]
    %v1409 = vld [vmem:[#allocation2 + $0x20] sm:$0xff]
    %v1410 = vld [vmem:[#allocation2 + $0x28] sm:$0xff]
    %v1411 = vld [vmem:[#allocation2 + $0x30] sm:$0xff]
    %v1412 = vld [vmem:[#allocation2 + $0x38] sm:$0xff]
    %v1413 = vld [vmem:[#allocation2 + $0x40] sm:$0xff]
    %v1414 = vld [vmem:[#allocation2 + $0x48] sm:$0xff]
    %v1415 = vld [vmem:[#allocation2 + $0x50] sm:$0xff]
    %v1416 = vld [vmem:[#allocation2 + $0x58] sm:$0xff]
    %v1417 = vld [vmem:[#allocation2 + $0x60] sm:$0xff]
    %v1418 = vld [vmem:[#allocation2 + $0x68] sm:$0xff]
    %v1419 = vld [vmem:[#allocation2 + $0x70] sm:$0xff]
    %v1420 = vld [vmem:[#allocation2 + $0x78] sm:$0xff]
    %v1421 = vld [vmem:[#allocation2 + $0x80] sm:$0xff]
    %v1422 = vld [vmem:[#allocation2 + $0x88] sm:$0xff]
    %v1423 = vld [vmem:[#allocation2 + $0x90] sm:$0xff]
    %v1424 = vld [vmem:[#allocation2 + $0x98] sm:$0xff]
    %v1425 = vld [vmem:[#allocation2 + $0xa0] sm:$0xff]
    %v1426 = vld [vmem:[#allocation2 + $0xa8] sm:$0xff]
    %v1427 = vld [vmem:[#allocation2 + $0xb0] sm:$0xff]
    %v1428 = vld [vmem:[#allocation2 + $0xb8] sm:$0xff]
    %v1429 = vld [vmem:[#allocation2 + $0xc0] sm:$0xff]
    %v1430 = vld [vmem:[#allocation2 + $0xc8] sm:$0xff]
    %v1431 = vld [vmem:[#allocation2 + $0xd0] sm:$0xff]
    %v1432 = vld [vmem:[#allocation2 + $0xd8] sm:$0xff]
    %v1433 = vld [vmem:[#allocation2 + $0xe0] sm:$0xff]
    %v1434 = vld [vmem:[#allocation2 + $0xe8] sm:$0xff]
    %v1435 = vld [vmem:[#allocation2 + $0xf0] sm:$0xff]
    %v1436 = vld [vmem:[#allocation2 + $0xf8] sm:$0xff]
    %v1437 = vld [vmem:[#allocation2 + $0x100] sm:$0xff]
    %v1438 = vld [vmem:[#allocation2 + $0x108] sm:$0xff]
    %v1439 = vld [vmem:[#allocation2 + $0x110] sm:$0xff]
    %v1440 = vld [vmem:[#allocation2 + $0x118] sm:$0xff]
    %v1441 = vld [vmem:[#allocation2 + $0x120] sm:$0xff]
    %v1442 = vld [vmem:[#allocation2 + $0x128] sm:$0xff]
    %v1443 = vld [vmem:[#allocation2 + $0x130] sm:$0xff]
    %v1444 = vld [vmem:[#allocation2 + $0x138] sm:$0xff]
    %v1445 = vld [vmem:[#allocation2 + $0x140] sm:$0xff]
    %v1446 = vld [vmem:[#allocation2 + $0x148] sm:$0xff]
    %v1447 = vld [vmem:[#allocation2 + $0x150] sm:$0xff]
    %v1448 = vld [vmem:[#allocation2 + $0x158] sm:$0xff]
    %v1449 = vld [vmem:[#allocation2 + $0x160] sm:$0xff]
    %v1450 = vld [vmem:[#allocation2 + $0x168] sm:$0xff]
    %v1451 = vld [vmem:[#allocation2 + $0x170] sm:$0xff]
    %v1452 = vld [vmem:[#allocation2 + $0x178] sm:$0xff]
    %v1453 = vld [vmem:[%s4] sm:$0x1]
    %v1455 = vlaneseq
    %v1456 = vshrl.u32 %v1455, 7
    %v1457 = vsub.s32 0, %v1456
    %v1458 = vrot.slane %v1453, %v1457
    %1460 = vmatprep.subr.mxu0 0.0
    %1461 = vmatpush1.msra.mxu0 %v1405
    %1462 = vmatprep.subr.mxu0 0.0
    %1463 = vmatpush1.msra.mxu0 %v1406
    %1464 = vmatprep.subr.mxu0 0.0
    %1465 = vmatpush1.msra.mxu0 %v1407
    %1466 = vmatprep.subr.mxu0 0.0
    %1467 = vmatpush1.msra.mxu0 %v1408
    %1468 = vmatprep.subr.mxu0 0.0
    %1469 = vmatpush1.msra.mxu0 %v1409
    %1470 = vmatprep.subr.mxu0 0.0
    %1471 = vmatpush1.msra.mxu0 %v1410
    %1472 = vmatprep.subr.mxu0 0.0
    %1473 = vmatpush1.msra.mxu0 %v1411
    %1474 = vmatprep.subr.mxu0 0.0
    %1475 = vmatpush1.msra.mxu0 %v1412
    %1476 = vmatprep.subr.mxu0 0.0
    %1477 = vmatpush1.msra.mxu0 %v1413
    %1478 = vmatprep.subr.mxu0 0.0
    %1479 = vmatpush1.msra.mxu0 %v1414
    %1480 = vmatprep.subr.mxu0 0.0
    %1481 = vmatpush1.msra.mxu0 %v1415
    %1482 = vmatprep.subr.mxu0 0.0
    %1483 = vmatpush1.msra.mxu0 %v1416
    %1484 = vmatprep.subr.mxu0 0.0
    %1485 = vmatpush1.msra.mxu0 %v1417
    %1486 = vmatprep.subr.mxu0 0.0
    %1487 = vmatpush1.msra.mxu0 %v1418
    %1488 = vmatprep.subr.mxu0 0.0
    %1489 = vmatpush1.msra.mxu0 %v1419
    %1490 = vmatprep.subr.mxu0 0.0
    %1491 = vmatpush1.msra.mxu0 %v1420
    %1492 = vmatprep.subr.mxu0 0.0
    %1493 = vmatpush1.msra.mxu0 %v1421
    %1494 = vmatprep.subr.mxu0 0.0
    %1495 = vmatpush1.msra.mxu0 %v1422
    %1496 = vmatprep.subr.mxu0 0.0
    %1497 = vmatpush1.msra.mxu0 %v1423
    %1498 = vmatprep.subr.mxu0 0.0
    %1499 = vmatpush1.msra.mxu0 %v1424
    %1500 = vmatprep.subr.mxu0 0.0
    %1501 = vmatpush1.msra.mxu0 %v1425
    %1502 = vmatprep.subr.mxu0 0.0
    %1503 = vmatpush1.msra.mxu0 %v1426
    %1504 = vmatprep.subr.mxu0 0.0
    %1505 = vmatpush1.msra.mxu0 %v1427
    %1506 = vmatprep.subr.mxu0 0.0
    %1507 = vmatpush1.msra.mxu0 %v1428
    %1508 = vmatprep.subr.mxu0 0.0
    %1509 = vmatpush1.msra.mxu0 %v1429
    %1510 = vmatprep.subr.mxu0 0.0
    %1511 = vmatpush1.msra.mxu0 %v1430
    %1512 = vmatprep.subr.mxu0 0.0
    %1513 = vmatpush1.msra.mxu0 %v1431
    %1514 = vmatprep.subr.mxu0 0.0
    %1515 = vmatpush1.msra.mxu0 %v1432
    %1516 = vmatprep.subr.mxu0 0.0
    %1517 = vmatpush1.msra.mxu0 %v1433
    %1518 = vmatprep.subr.mxu0 0.0
    %1519 = vmatpush1.msra.mxu0 %v1434
    %1520 = vmatprep.subr.mxu0 0.0
    %1521 = vmatpush1.msra.mxu0 %v1435
    %1522 = vmatprep.subr.mxu0 0.0
    %1523 = vmatpush1.msra.mxu0 %v1436
    %1524 = vmatprep.mubr.f32.mxu0 %v1393
    %1525 = vmatmul.mubr.f32.gmra.mrb[0].mxu0 %v1387
    %v1526 = vpop.f32.mrb[0].mxu0
    %v1527 = vadd.f32 %v1458, %v1526
    %v1528 = vpop.f32.mrb[0].mxu0
    %1529 = vmatprep.mubr.f32.mxu0 %v1395
    %1530 = vmatmul.mubr.f32.gmra.mrb[0].mxu0 %v1383
    %v1531 = vpop.f32.mrb[0].mxu0
    %v1532 = vadd.f32 %v1458, %v1531
    %v1533 = vpop.f32.mrb[0].mxu0
    %1534 = vdwg.mxu0
    %1535 = vmatprep.subr.mxu0 0.0
    %1536 = vmatpush1.msra.mxu0 %v1437
    %1537 = vmatprep.subr.mxu0 0.0
    %1538 = vmatpush1.msra.mxu0 %v1438
    %1539 = vmatprep.subr.mxu0 0.0
    %1540 = vmatpush1.msra.mxu0 %v1439
    %1541 = vmatprep.subr.mxu0 0.0
    %1542 = vmatpush1.msra.mxu0 %v1440
    %1543 = vmatprep.subr.mxu0 0.0
    %1544 = vmatpush1.msra.mxu0 %v1441
    %1545 = vmatprep.subr.mxu0 0.0
    %1546 = vmatpush1.msra.mxu0 %v1442
    %1547 = vmatprep.subr.mxu0 0.0
    %1548 = vmatpush1.msra.mxu0 %v1443
    %1549 = vmatprep.subr.mxu0 0.0
    %1550 = vmatpush1.msra.mxu0 %v1444
    %1551 = vmatprep.subr.mxu0 0.0
    %1552 = vmatpush1.msra.mxu0 %v1445
    %1553 = vmatprep.subr.mxu0 0.0
    %1554 = vmatpush1.msra.mxu0 %v1446
    %1555 = vmatprep.subr.mxu0 0.0
    %1556 = vmatpush1.msra.mxu0 %v1447
    %1557 = vmatprep.subr.mxu0 0.0
    %1558 = vmatpush1.msra.mxu0 %v1448
    %1559 = vmatprep.subr.mxu0 0.0
    %1560 = vmatpush1.msra.mxu0 %v1449
    %1561 = vmatprep.subr.mxu0 0.0
    %1562 = vmatpush1.msra.mxu0 %v1450
    %1563 = vmatprep.subr.mxu0 0.0
    %1564 = vmatpush1.msra.mxu0 %v1451
    %1565 = vmatprep.subr.mxu0 0.0
    %1566 = vmatpush1.msra.mxu0 %v1452
    %1567 = vmatprep.subr.mxu0 0.0
    %1568 = vmatpush1.msra.mxu0 0.0
    %1569 = vmatprep.subr.mxu0 0.0
    %1570 = vmatpush1.msra.mxu0 0.0
    %1571 = vmatprep.subr.mxu0 0.0
    %1572 = vmatpush1.msra.mxu0 0.0
    %1573 = vmatprep.subr.mxu0 0.0
    %1574 = vmatpush1.msra.mxu0 0.0
    %1575 = vmatprep.subr.mxu0 0.0
    %1576 = vmatpush1.msra.mxu0 0.0
    %1577 = vmatprep.subr.mxu0 0.0
    %1578 = vmatpush1.msra.mxu0 0.0
    %1579 = vmatprep.subr.mxu0 0.0
    %1580 = vmatpush1.msra.mxu0 0.0
    %1581 = vmatprep.subr.mxu0 0.0
    %1582 = vmatpush1.msra.mxu0 0.0
    %1583 = vmatprep.subr.mxu0 0.0
    %1584 = vmatpush1.msra.mxu0 0.0
    %1585 = vmatprep.subr.mxu0 0.0
    %1586 = vmatpush1.msra.mxu0 0.0
    %1587 = vmatprep.subr.mxu0 0.0
    %1588 = vmatpush1.msra.mxu0 0.0
    %1589 = vmatprep.subr.mxu0 0.0
    %1590 = vmatpush1.msra.mxu0 0.0
    %1591 = vmatprep.subr.mxu0 0.0
    %1592 = vmatpush1.msra.mxu0 0.0
    %1593 = vmatprep.subr.mxu0 0.0
    %1594 = vmatpush1.msra.mxu0 0.0
    %1595 = vmatprep.subr.mxu0 0.0
    %1596 = vmatpush1.msra.mxu0 0.0
    %1597 = vmatprep.subr.mxu0 0.0
    %1598 = vmatpush1.msra.mxu0 0.0
    %1599 = vmatprep.mubr.f32.mxu0 0.0
    %1600 = vmatmul.mubr.f32.gmra.mrb[0].mxu0 %v1400
    %v1601 = vpop.f32.mrb[0].mxu0
    %v1602 = vadd.f32 %v1527, %v1601
    %v1603 = vpop.f32.mrb[0].mxu0
    %1604 = vmatprep.mubr.f32.mxu0 0.0
    %1605 = vmatmul.mubr.f32.gmra.mrb[0].mxu0 %v1402
    %v1606 = vpop.f32.mrb[0].mxu0
    %v1607 = vadd.f32 %v1532, %v1606
    %v1608 = vpop.f32.mrb[0].mxu0
    %1609 = vdwg.mxu0
    %v1610 = vmax.f32 %v1602, 0.0
    %v1611 = vmax.f32 %v1607, 0.0
    %v1614 = vrot.slane %v1610, 1
    %v1615 = vrot.slane %v1611, 1
    %v1616 = vsel %vm168, %v1614, %v1615
    %v1619 = vmax.f32 %v1610, %v1616
    %v1620 = vmax.f32 %v1611, %v1615
    %v1621 = vrot.slane %v1610, 2
    %v1622 = vrot.slane %v1611, 2
    %v1623 = vsel %vm257, %v1621, %v1622
    %v1626 = vmax.f32 %v1619, %v1623
    %v1627 = vmax.f32 %v1620, %v1622
    %v1628 = vrot.slane %v1610, 3
    %v1629 = vrot.slane %v1611, 3
    %v1630 = vsel %vm614, %v1628, %v1629
    %v1633 = vmax.f32 %v1626, %v1630
    %v1634 = vmax.f32 %v1627, %v1629
    %v1635 = vrot.slane %v1610, 4
    %v1636 = vrot.slane %v1611, 4
    %v1637 = vsel %vm622, %v1635, %v1636
    %v1640 = vmax.f32 %v1633, %v1637
    %v1641 = vmax.f32 %v1634, %v1636
    %v1643 = vrot.slane %v1640, 2
    %v1645 = vrot.slane %v1640, 4
    %v1648 = vrot.slane %v1641, 6
    %v1650 = vsel %vm78, %v1640, %v1643
    %v1651 = vsel %vm639, %v1650, %v1645
    %v1652 = vsel %vm641, %v1651, %v1648
    %v1654 = vrot.slane %v1652, 7
    %v1656 = vsel %vm78, 0.0, %v1654
    %v1657 = vsel %vm614, %v1656, 0.0
    %v1659 = vrot.slane %v1657, 1
    %v1661 = vrot.slane %v1657, 2
    %v1663 = vld [vmem:[#allocation5] sm:$0xff]
    %v1664 = vld [vmem:[#allocation5 + $0x8] sm:$0xff]
    %v1665 = vld [vmem:[#allocation5 + $0x10] sm:$0xff]
    %v1666 = vld [vmem:[#allocation5 + $0x18] sm:$0xff]
    %v1667 = vld [vmem:[#allocation5 + $0x20] sm:$0xff]
    %v1668 = vld [vmem:[#allocation5 + $0x28] sm:$0xff]
    %v1669 = vld [vmem:[#allocation5 + $0x30] sm:$0xff]
    %v1670 = vld [vmem:[#allocation5 + $0x38] sm:$0xff]
    %v1671 = vld [vmem:[#allocation5 + $0x40] sm:$0xff]
    %v1672 = vld [vmem:[#allocation5 + $0x48] sm:$0xff]
    %v1673 = vld [vmem:[#allocation5 + $0x50] sm:$0xff]
    %v1674 = vld [vmem:[#allocation5 + $0x58] sm:$0xff]
    %v1675 = vld [vmem:[#allocation5 + $0x60] sm:$0xff]
    %v1676 = vld [vmem:[#allocation5 + $0x68] sm:$0xff]
    %v1677 = vld [vmem:[#allocation5 + $0x70] sm:$0xff]
    %v1678 = vld [vmem:[#allocation5 + $0x78] sm:$0xff]
    %v1679 = vld [vmem:[#allocation5 + $0x80] sm:$0xff]
    %v1680 = vld [vmem:[#allocation5 + $0x88] sm:$0xff]
    %v1681 = vld [vmem:[#allocation5 + $0x90] sm:$0xff]
    %v1682 = vld [vmem:[#allocation5 + $0x98] sm:$0xff]
    %v1683 = vld [vmem:[#allocation5 + $0xa0] sm:$0xff]
    %v1684 = vld [vmem:[#allocation5 + $0xa8] sm:$0xff]
    %v1685 = vld [vmem:[#allocation5 + $0xb0] sm:$0xff]
    %v1686 = vld [vmem:[#allocation5 + $0xb8] sm:$0xff]
    %v1687 = vld [vmem:[#allocation5 + $0xc0] sm:$0xff]
    %v1688 = vld [vmem:[#allocation5 + $0xc8] sm:$0xff]
    %v1689 = vld [vmem:[#allocation5 + $0xd0] sm:$0xff]
    %v1690 = vld [vmem:[#allocation5 + $0xd8] sm:$0xff]
    %v1691 = vld [vmem:[#allocation5 + $0xe0] sm:$0xff]
    %v1692 = vld [vmem:[#allocation5 + $0xe8] sm:$0xff]
    %v1693 = vld [vmem:[#allocation5 + $0xf0] sm:$0xff]
    %v1694 = vld [vmem:[#allocation5 + $0xf8] sm:$0xff]
    %v1695 = vld [vmem:[#allocation5 + $0x100] sm:$0xff]
    %v1696 = vld [vmem:[#allocation5 + $0x108] sm:$0xff]
    %v1697 = vld [vmem:[#allocation5 + $0x110] sm:$0xff]
    %v1698 = vld [vmem:[#allocation5 + $0x118] sm:$0xff]
    %v1699 = vld [vmem:[#allocation5 + $0x120] sm:$0xff]
    %v1700 = vld [vmem:[#allocation5 + $0x128] sm:$0xff]
    %v1701 = vld [vmem:[#allocation5 + $0x130] sm:$0xff]
    %v1702 = vld [vmem:[#allocation5 + $0x138] sm:$0xff]
    %v1703 = vld [vmem:[#allocation5 + $0x140] sm:$0xff]
    %v1704 = vld [vmem:[#allocation5 + $0x148] sm:$0xff]
    %v1705 = vld [vmem:[#allocation5 + $0x150] sm:$0xff]
    %v1706 = vld [vmem:[#allocation5 + $0x158] sm:$0xff]
    %v1707 = vld [vmem:[#allocation5 + $0x160] sm:$0xff]
    %v1708 = vld [vmem:[#allocation5 + $0x168] sm:$0xff]
    %v1709 = vld [vmem:[#allocation5 + $0x170] sm:$0xff]
    %v1710 = vld [vmem:[#allocation5 + $0x178] sm:$0xff]
    %v1711 = vld [vmem:[%s6] sm:$0x1]
    %v1713 = vlaneseq
    %v1714 = vshrl.u32 %v1713, 7
    %v1715 = vsub.s32 0, %v1714
    %v1716 = vrot.slane %v1711, %v1715
    %1718 = vmatprep.subr.mxu0 0.0
    %1719 = vmatpush1.msra.mxu0 %v1663
    %1720 = vmatprep.subr.mxu0 0.0
    %1721 = vmatpush1.msra.mxu0 %v1664
    %1722 = vmatprep.subr.mxu0 0.0
    %1723 = vmatpush1.msra.mxu0 %v1665
    %1724 = vmatprep.subr.mxu0 0.0
    %1725 = vmatpush1.msra.mxu0 %v1666
    %1726 = vmatprep.subr.mxu0 0.0
    %1727 = vmatpush1.msra.mxu0 %v1667
    %1728 = vmatprep.subr.mxu0 0.0
    %1729 = vmatpush1.msra.mxu0 %v1668
    %1730 = vmatprep.subr.mxu0 0.0
    %1731 = vmatpush1.msra.mxu0 %v1669
    %1732 = vmatprep.subr.mxu0 0.0
    %1733 = vmatpush1.msra.mxu0 %v1670
    %1734 = vmatprep.subr.mxu0 0.0
    %1735 = vmatpush1.msra.mxu0 %v1671
    %1736 = vmatprep.subr.mxu0 0.0
    %1737 = vmatpush1.msra.mxu0 %v1672
    %1738 = vmatprep.subr.mxu0 0.0
    %1739 = vmatpush1.msra.mxu0 %v1673
    %1740 = vmatprep.subr.mxu0 0.0
    %1741 = vmatpush1.msra.mxu0 %v1674
    %1742 = vmatprep.subr.mxu0 0.0
    %1743 = vmatpush1.msra.mxu0 %v1675
    %1744 = vmatprep.subr.mxu0 0.0
    %1745 = vmatpush1.msra.mxu0 %v1676
    %1746 = vmatprep.subr.mxu0 0.0
    %1747 = vmatpush1.msra.mxu0 %v1677
    %1748 = vmatprep.subr.mxu0 0.0
    %1749 = vmatpush1.msra.mxu0 %v1678
    %1750 = vmatprep.subr.mxu0 0.0
    %1751 = vmatpush1.msra.mxu0 %v1679
    %1752 = vmatprep.subr.mxu0 0.0
    %1753 = vmatpush1.msra.mxu0 %v1680
    %1754 = vmatprep.subr.mxu0 0.0
    %1755 = vmatpush1.msra.mxu0 %v1681
    %1756 = vmatprep.subr.mxu0 0.0
    %1757 = vmatpush1.msra.mxu0 %v1682
    %1758 = vmatprep.subr.mxu0 0.0
    %1759 = vmatpush1.msra.mxu0 %v1683
    %1760 = vmatprep.subr.mxu0 0.0
    %1761 = vmatpush1.msra.mxu0 %v1684
    %1762 = vmatprep.subr.mxu0 0.0
    %1763 = vmatpush1.msra.mxu0 %v1685
    %1764 = vmatprep.subr.mxu0 0.0
    %1765 = vmatpush1.msra.mxu0 %v1686
    %1766 = vmatprep.subr.mxu0 0.0
    %1767 = vmatpush1.msra.mxu0 %v1687
    %1768 = vmatprep.subr.mxu0 0.0
    %1769 = vmatpush1.msra.mxu0 %v1688
    %1770 = vmatprep.subr.mxu0 0.0
    %1771 = vmatpush1.msra.mxu0 %v1689
    %1772 = vmatprep.subr.mxu0 0.0
    %1773 = vmatpush1.msra.mxu0 %v1690
    %1774 = vmatprep.subr.mxu0 0.0
    %1775 = vmatpush1.msra.mxu0 %v1691
    %1776 = vmatprep.subr.mxu0 0.0
    %1777 = vmatpush1.msra.mxu0 %v1692
    %1778 = vmatprep.subr.mxu0 0.0
    %1779 = vmatpush1.msra.mxu0 %v1693
    %1780 = vmatprep.subr.mxu0 0.0
    %1781 = vmatpush1.msra.mxu0 %v1694
    %1782 = vmatprep.mubr.f32.mxu0 %v1659
    %1783 = vmatmul.mubr.f32.gmra.mrb[0].mxu0 %v1657
    %v1784 = vpop.f32.mrb[0].mxu0
    %v1785 = vadd.f32 %v1716, %v1784
    %v1786 = vpop.f32.mrb[0].mxu0
    %1787 = vdwg.mxu0
    %1788 = vmatprep.subr.mxu0 0.0
    %1789 = vmatpush1.msra.mxu0 %v1695
    %1790 = vmatprep.subr.mxu0 0.0
    %1791 = vmatpush1.msra.mxu0 %v1696
    %1792 = vmatprep.subr.mxu0 0.0
    %1793 = vmatpush1.msra.mxu0 %v1697
    %1794 = vmatprep.subr.mxu0 0.0
    %1795 = vmatpush1.msra.mxu0 %v1698
    %1796 = vmatprep.subr.mxu0 0.0
    %1797 = vmatpush1.msra.mxu0 %v1699
    %1798 = vmatprep.subr.mxu0 0.0
    %1799 = vmatpush1.msra.mxu0 %v1700
    %1800 = vmatprep.subr.mxu0 0.0
    %1801 = vmatpush1.msra.mxu0 %v1701
    %1802 = vmatprep.subr.mxu0 0.0
    %1803 = vmatpush1.msra.mxu0 %v1702
    %1804 = vmatprep.subr.mxu0 0.0
    %1805 = vmatpush1.msra.mxu0 %v1703
    %1806 = vmatprep.subr.mxu0 0.0
    %1807 = vmatpush1.msra.mxu0 %v1704
    %1808 = vmatprep.subr.mxu0 0.0
    %1809 = vmatpush1.msra.mxu0 %v1705
    %1810 = vmatprep.subr.mxu0 0.0
    %1811 = vmatpush1.msra.mxu0 %v1706
    %1812 = vmatprep.subr.mxu0 0.0
    %1813 = vmatpush1.msra.mxu0 %v1707
    %1814 = vmatprep.subr.mxu0 0.0
    %1815 = vmatpush1.msra.mxu0 %v1708
    %1816 = vmatprep.subr.mxu0 0.0
    %1817 = vmatpush1.msra.mxu0 %v1709
    %1818 = vmatprep.subr.mxu0 0.0
    %1819 = vmatpush1.msra.mxu0 %v1710
    %1820 = vmatprep.subr.mxu0 0.0
    %1821 = vmatpush1.msra.mxu0 0.0
    %1822 = vmatprep.subr.mxu0 0.0
    %1823 = vmatpush1.msra.mxu0 0.0
    %1824 = vmatprep.subr.mxu0 0.0
    %1825 = vmatpush1.msra.mxu0 0.0
    %1826 = vmatprep.subr.mxu0 0.0
    %1827 = vmatpush1.msra.mxu0 0.0
    %1828 = vmatprep.subr.mxu0 0.0
    %1829 = vmatpush1.msra.mxu0 0.0
    %1830 = vmatprep.subr.mxu0 0.0
    %1831 = vmatpush1.msra.mxu0 0.0
    %1832 = vmatprep.subr.mxu0 0.0
    %1833 = vmatpush1.msra.mxu0 0.0
    %1834 = vmatprep.subr.mxu0 0.0
    %1835 = vmatpush1.msra.mxu0 0.0
    %1836 = vmatprep.subr.mxu0 0.0
    %1837 = vmatpush1.msra.mxu0 0.0
    %1838 = vmatprep.subr.mxu0 0.0
    %1839 = vmatpush1.msra.mxu0 0.0
    %1840 = vmatprep.subr.mxu0 0.0
    %1841 = vmatpush1.msra.mxu0 0.0
    %1842 = vmatprep.subr.mxu0 0.0
    %1843 = vmatpush1.msra.mxu0 0.0
    %1844 = vmatprep.subr.mxu0 0.0
    %1845 = vmatpush1.msra.mxu0 0.0
    %1846 = vmatprep.subr.mxu0 0.0
    %1847 = vmatpush1.msra.mxu0 0.0
    %1848 = vmatprep.subr.mxu0 0.0
    %1849 = vmatpush1.msra.mxu0 0.0
    %1850 = vmatprep.subr.mxu0 0.0
    %1851 = vmatpush1.msra.mxu0 0.0
    %1852 = vmatprep.mubr.f32.mxu0 0.0
    %1853 = vmatmul.mubr.f32.gmra.mrb[0].mxu0 %v1661
    %v1854 = vpop.f32.mrb[0].mxu0
    %v1855 = vadd.f32 %v1785, %v1854
    %v1856 = vpop.f32.mrb[0].mxu0
    %1857 = vdwg.mxu0
    %v1858 = vmax.f32 %v1855, 0.0
    %v1860 = vrot.slane %v1858, 7
    %v1862 = vsel %vm78, -inf, %v1860
    %v1863 = vsel %vm614, %v1862, -inf
    %v1865 = vrot.slane %v1863, 1
    %v1867 = vmax.f32 %v1863, %v1865
    %v1868 = vrot.slane %v1863, 2
    %v1870 = vmax.f32 %v1867, %v1868
    %v1871 = vrot.slane %v1863, 3
    %v1873 = vmax.f32 %v1870, %v1871
    %v1875 = vrot.slane %v1873, 1
    %v1877 = vsel %vm78, %v1873, %v1875
    %v1879 = vrot.slane %v1877, 7
    %v1881 = vsel %vm78, 0.0, %v1879
    %v1882 = vsel %vm641, %v1881, 0.0
    %v1884 = vrot.slane %v1882, 1
    %v1886 = vrot.slane %v1882, 2
    %v1888 = vld [vmem:[#allocation7] sm:$0xff]
    %v1889 = vld [vmem:[#allocation7 + $0x8] sm:$0xff]
    %v1890 = vld [vmem:[#allocation7 + $0x10] sm:$0xff]
    %v1891 = vld [vmem:[#allocation7 + $0x18] sm:$0xff]
    %v1892 = vld [vmem:[#allocation7 + $0x20] sm:$0xff]
    %v1893 = vld [vmem:[#allocation7 + $0x28] sm:$0xff]
    %v1894 = vld [vmem:[#allocation7 + $0x30] sm:$0xff]
    %v1895 = vld [vmem:[#allocation7 + $0x38] sm:$0xff]
    %v1896 = vld [vmem:[#allocation7 + $0x40] sm:$0xff]
    %v1897 = vld [vmem:[#allocation7 + $0x48] sm:$0xff]
    %v1898 = vld [vmem:[#allocation7 + $0x50] sm:$0xff]
    %v1899 = vld [vmem:[#allocation7 + $0x58] sm:$0xff]
    %v1900 = vld [vmem:[#allocation7 + $0x60] sm:$0xff]
    %v1901 = vld [vmem:[#allocation7 + $0x68] sm:$0xff]
    %v1902 = vld [vmem:[#allocation7 + $0x70] sm:$0xff]
    %v1903 = vld [vmem:[#allocation7 + $0x78] sm:$0xff]
    %v1904 = vld [vmem:[#allocation7 + $0x80] sm:$0xff]
    %v1905 = vld [vmem:[#allocation7 + $0x88] sm:$0xff]
    %v1906 = vld [vmem:[#allocation7 + $0x90] sm:$0xff]
    %v1907 = vld [vmem:[#allocation7 + $0x98] sm:$0xff]
    %v1908 = vld [vmem:[#allocation7 + $0xa0] sm:$0xff]
    %v1909 = vld [vmem:[#allocation7 + $0xa8] sm:$0xff]
    %v1910 = vld [vmem:[#allocation7 + $0xb0] sm:$0xff]
    %v1911 = vld [vmem:[#allocation7 + $0xb8] sm:$0xff]
    %v1912 = vld [vmem:[#allocation7 + $0xc0] sm:$0xff]
    %v1913 = vld [vmem:[#allocation7 + $0xc8] sm:$0xff]
    %v1914 = vld [vmem:[#allocation7 + $0xd0] sm:$0xff]
    %v1915 = vld [vmem:[#allocation7 + $0xd8] sm:$0xff]
    %v1916 = vld [vmem:[#allocation7 + $0xe0] sm:$0xff]
    %v1917 = vld [vmem:[#allocation7 + $0xe8] sm:$0xff]
    %v1918 = vld [vmem:[#allocation7 + $0xf0] sm:$0xff]
    %v1919 = vld [vmem:[#allocation7 + $0xf8] sm:$0xff]
    %v1920 = vld [vmem:[#allocation7 + $0x100] sm:$0xff]
    %v1921 = vld [vmem:[#allocation7 + $0x108] sm:$0xff]
    %v1922 = vld [vmem:[#allocation7 + $0x110] sm:$0xff]
    %v1923 = vld [vmem:[#allocation7 + $0x118] sm:$0xff]
    %v1924 = vld [vmem:[#allocation7 + $0x120] sm:$0xff]
    %v1925 = vld [vmem:[#allocation7 + $0x128] sm:$0xff]
    %v1926 = vld [vmem:[#allocation7 + $0x130] sm:$0xff]
    %v1927 = vld [vmem:[#allocation7 + $0x138] sm:$0xff]
    %v1928 = vld [vmem:[#allocation7 + $0x140] sm:$0xff]
    %v1929 = vld [vmem:[#allocation7 + $0x148] sm:$0xff]
    %v1930 = vld [vmem:[#allocation7 + $0x150] sm:$0xff]
    %v1931 = vld [vmem:[#allocation7 + $0x158] sm:$0xff]
    %v1932 = vld [vmem:[#allocation7 + $0x160] sm:$0xff]
    %v1933 = vld [vmem:[#allocation7 + $0x168] sm:$0xff]
    %v1934 = vld [vmem:[#allocation7 + $0x170] sm:$0xff]
    %v1935 = vld [vmem:[#allocation7 + $0x178] sm:$0xff]
    %v1936 = vld [vmem:[%s8] sm:$0x1]
    %v1938 = vlaneseq
    %v1939 = vshrl.u32 %v1938, 7
    %v1940 = vsub.s32 0, %v1939
    %v1941 = vrot.slane %v1936, %v1940
    %1943 = vmatprep.subr.mxu0 0.0
    %1944 = vmatpush1.msra.mxu0 %v1888
    %1945 = vmatprep.subr.mxu0 0.0
    %1946 = vmatpush1.msra.mxu0 %v1889
    %1947 = vmatprep.subr.mxu0 0.0
    %1948 = vmatpush1.msra.mxu0 %v1890
    %1949 = vmatprep.subr.mxu0 0.0
    %1950 = vmatpush1.msra.mxu0 %v1891
    %1951 = vmatprep.subr.mxu0 0.0
    %1952 = vmatpush1.msra.mxu0 %v1892
    %1953 = vmatprep.subr.mxu0 0.0
    %1954 = vmatpush1.msra.mxu0 %v1893
    %1955 = vmatprep.subr.mxu0 0.0
    %1956 = vmatpush1.msra.mxu0 %v1894
    %1957 = vmatprep.subr.mxu0 0.0
    %1958 = vmatpush1.msra.mxu0 %v1895
    %1959 = vmatprep.subr.mxu0 0.0
    %1960 = vmatpush1.msra.mxu0 %v1896
    %1961 = vmatprep.subr.mxu0 0.0
    %1962 = vmatpush1.msra.mxu0 %v1897
    %1963 = vmatprep.subr.mxu0 0.0
    %1964 = vmatpush1.msra.mxu0 %v1898
    %1965 = vmatprep.subr.mxu0 0.0
    %1966 = vmatpush1.msra.mxu0 %v1899
    %1967 = vmatprep.subr.mxu0 0.0
    %1968 = vmatpush1.msra.mxu0 %v1900
    %1969 = vmatprep.subr.mxu0 0.0
    %1970 = vmatpush1.msra.mxu0 %v1901
    %1971 = vmatprep.subr.mxu0 0.0
    %1972 = vmatpush1.msra.mxu0 %v1902
    %1973 = vmatprep.subr.mxu0 0.0
    %1974 = vmatpush1.msra.mxu0 %v1903
    %1975 = vmatprep.subr.mxu0 0.0
    %1976 = vmatpush1.msra.mxu0 %v1904
    %1977 = vmatprep.subr.mxu0 0.0
    %1978 = vmatpush1.msra.mxu0 %v1905
    %1979 = vmatprep.subr.mxu0 0.0
    %1980 = vmatpush1.msra.mxu0 %v1906
    %1981 = vmatprep.subr.mxu0 0.0
    %1982 = vmatpush1.msra.mxu0 %v1907
    %1983 = vmatprep.subr.mxu0 0.0
    %1984 = vmatpush1.msra.mxu0 %v1908
    %1985 = vmatprep.subr.mxu0 0.0
    %1986 = vmatpush1.msra.mxu0 %v1909
    %1987 = vmatprep.subr.mxu0 0.0
    %1988 = vmatpush1.msra.mxu0 %v1910
    %1989 = vmatprep.subr.mxu0 0.0
    %1990 = vmatpush1.msra.mxu0 %v1911
    %1991 = vmatprep.subr.mxu0 0.0
    %1992 = vmatpush1.msra.mxu0 %v1912
    %1993 = vmatprep.subr.mxu0 0.0
    %1994 = vmatpush1.msra.mxu0 %v1913
    %1995 = vmatprep.subr.mxu0 0.0
    %1996 = vmatpush1.msra.mxu0 %v1914
    %1997 = vmatprep.subr.mxu0 0.0
    %1998 = vmatpush1.msra.mxu0 %v1915
    %1999 = vmatprep.subr.mxu0 0.0
    %2000 = vmatpush1.msra.mxu0 %v1916
    %2001 = vmatprep.subr.mxu0 0.0
    %2002 = vmatpush1.msra.mxu0 %v1917
    %2003 = vmatprep.subr.mxu0 0.0
    %2004 = vmatpush1.msra.mxu0 %v1918
    %2005 = vmatprep.subr.mxu0 0.0
    %2006 = vmatpush1.msra.mxu0 %v1919
    %2007 = vmatprep.mubr.f32.mxu0 %v1884
    %2008 = vmatmul.mubr.f32.gmra.mrb[0].mxu0 %v1882
    %v2009 = vpop.f32.mrb[0].mxu0
    %v2010 = vadd.f32 %v1941, %v2009
    %v2011 = vpop.f32.mrb[0].mxu0
    %2012 = vdwg.mxu0
    %2013 = vmatprep.subr.mxu0 0.0
    %2014 = vmatpush1.msra.mxu0 %v1920
    %2015 = vmatprep.subr.mxu0 0.0
    %2016 = vmatpush1.msra.mxu0 %v1921
    %2017 = vmatprep.subr.mxu0 0.0
    %2018 = vmatpush1.msra.mxu0 %v1922
    %2019 = vmatprep.subr.mxu0 0.0
    %2020 = vmatpush1.msra.mxu0 %v1923
    %2021 = vmatprep.subr.mxu0 0.0
    %2022 = vmatpush1.msra.mxu0 %v1924
    %2023 = vmatprep.subr.mxu0 0.0
    %2024 = vmatpush1.msra.mxu0 %v1925
    %2025 = vmatprep.subr.mxu0 0.0
    %2026 = vmatpush1.msra.mxu0 %v1926
    %2027 = vmatprep.subr.mxu0 0.0
    %2028 = vmatpush1.msra.mxu0 %v1927
    %2029 = vmatprep.subr.mxu0 0.0
    %2030 = vmatpush1.msra.mxu0 %v1928
    %2031 = vmatprep.subr.mxu0 0.0
    %2032 = vmatpush1.msra.mxu0 %v1929
    %2033 = vmatprep.subr.mxu0 0.0
    %2034 = vmatpush1.msra.mxu0 %v1930
    %2035 = vmatprep.subr.mxu0 0.0
    %2036 = vmatpush1.msra.mxu0 %v1931
    %2037 = vmatprep.subr.mxu0 0.0
    %2038 = vmatpush1.msra.mxu0 %v1932
    %2039 = vmatprep.subr.mxu0 0.0
    %2040 = vmatpush1.msra.mxu0 %v1933
    %2041 = vmatprep.subr.mxu0 0.0
    %2042 = vmatpush1.msra.mxu0 %v1934
    %2043 = vmatprep.subr.mxu0 0.0
    %2044 = vmatpush1.msra.mxu0 %v1935
    %2045 = vmatprep.subr.mxu0 0.0
    %2046 = vmatpush1.msra.mxu0 0.0
    %2047 = vmatprep.subr.mxu0 0.0
    %2048 = vmatpush1.msra.mxu0 0.0
    %2049 = vmatprep.subr.mxu0 0.0
    %2050 = vmatpush1.msra.mxu0 0.0
    %2051 = vmatprep.subr.mxu0 0.0
    %2052 = vmatpush1.msra.mxu0 0.0
    %2053 = vmatprep.subr.mxu0 0.0
    %2054 = vmatpush1.msra.mxu0 0.0
    %2055 = vmatprep.subr.mxu0 0.0
    %2056 = vmatpush1.msra.mxu0 0.0
    %2057 = vmatprep.subr.mxu0 0.0
    %2058 = vmatpush1.msra.mxu0 0.0
    %2059 = vmatprep.subr.mxu0 0.0
    %2060 = vmatpush1.msra.mxu0 0.0
    %2061 = vmatprep.subr.mxu0 0.0
    %2062 = vmatpush1.msra.mxu0 0.0
    %2063 = vmatprep.subr.mxu0 0.0
    %2064 = vmatpush1.msra.mxu0 0.0
    %2065 = vmatprep.subr.mxu0 0.0
    %2066 = vmatpush1.msra.mxu0 0.0
    %2067 = vmatprep.subr.mxu0 0.0
    %2068 = vmatpush1.msra.mxu0 0.0
    %2069 = vmatprep.subr.mxu0 0.0
    %2070 = vmatpush1.msra.mxu0 0.0
    %2071 = vmatprep.subr.mxu0 0.0
    %2072 = vmatpush1.msra.mxu0 0.0
    %2073 = vmatprep.subr.mxu0 0.0
    %2074 = vmatpush1.msra.mxu0 0.0
    %2075 = vmatprep.subr.mxu0 0.0
    %2076 = vmatpush1.msra.mxu0 0.0
    %2077 = vmatprep.mubr.f32.mxu0 0.0
    %2078 = vmatmul.mubr.f32.gmra.mrb[0].mxu0 %v1886
    %v2079 = vpop.f32.mrb[0].mxu0
    %v2080 = vadd.f32 %v2010, %v2079
    %v2081 = vpop.f32.mrb[0].mxu0
    %2082 = vdwg.mxu0
    %v2083 = vmax.f32 %v2080, 0.0
    %v2085 = vrot.slane %v2083, 7
    %v2087 = vsel %vm78, -inf, %v2085
    %v2088 = vsel %vm641, %v2087, -inf
    %v2090 = vrot.slane %v2088, 1
    %v2092 = vmax.f32 %v2088, %v2090
    %v2093 = vrot.slane %v2088, 2
    %v2095 = vmax.f32 %v2092, %v2093
    %v2096 = vrot.slane %v2088, 3
    %v2098 = vmax.f32 %v2095, %v2096
    %s2099 = scalar_lea.vmem [#allocation8], 1
    %2100 = vst [vmem:[%s2099] sm:$0x1] %v2098
    // Predicated region
    $region50: #{mhc_model_forward.1} parent=1 // pred_check
      _
    $region51: #{mhc_model_forward.1} parent=1 // pred_check_branch
      %2102 = sbr.rel (0) target = $region53
    $region52: #{mhc_model_forward.1} parent=1 // pred_region
      %s2104 = ssub.s32 32, 32
      %2105 = vsyncadd [#allocation4], %s2104
      %s2106 = sshll.u32 [#allocation8], 4
      %s2107 = int_to_ptr.vmem [resolvable:$true] %s2106
      %2112 = dma.vmem_to_hbm [thread:$0]  %s2107, 32, %s9, [#allocation4], 16, 16, 1
    $region53: #{mhc_model_forward.1} parent=1 // pred_fallthru
      _
    // Predicated region
    $region54: #{mhc_model_forward.1} parent=1 // pred_check
      _
    $region55: #{mhc_model_forward.1} parent=1 // pred_check_branch
      %2114 = sbr.rel (0) target = $region57
    $region56: #{mhc_model_forward.1} parent=1 // pred_region
      %2115 = dma.done [#allocation4], 32
    $region57: #{mhc_model_forward.1} parent=1 // pred_fallthru
      _
    %2116 = vsyncpa [#allocation3], 1
    %2117 = vsyncpa [#allocation6], 1
    %2118 = vsyncpa [#allocation4], 1

</llo_original>
